<compile_context>
chip_gen: v7x
topology: tpu7x:2x2x1
jax: 0.10.0
libtpu: 0.0.40
codegen_flags: <defaults>
</compile_context>

<pallas_src>
import jax
import jax.numpy as jnp
import numpy as np
from jax.experimental import pallas as pl
from jax.experimental.pallas import tpu as pltpu

NEG_SLOPE = 0.01  # F.leaky_relu default negative_slope


def _gat_kernel(zw_ref, e_ref, adj_ref, s_src_ref, s_dst_ref, w_eattn_ref,
                w2e_ref, out_ref):
    """One program = one tile of TILE destination nodes.

    zw_ref     : [N_src, Dout_pad]  bf16  z @ W2_z (fc2 z-path pre-applied, lane-padded)
    e_ref      : [TILE, Ein*N_src]  bf16  raw edge features, src-minor (feature-major slabs)
    adj_ref    : [TILE, N_src]      bf16  adjacency mask (dst-major)
    s_src_ref  : [1, N_src]         f32   z @ a_src     (grid-invariant)
    s_dst_ref  : [TILE, 1]          f32   z @ a_dst     (rows of this dst tile)
    w_eattn_ref: [1, Ein]           f32   W_e @ a_eft   (fc_e folded into attn_fc)
    w2e_ref    : [Ein, Dout_pad]    f32   W_e @ W2_e    (fc_e folded into fc2, padded)
    out_ref    : [TILE, Dout_pad]   f32
    """
    f32 = jnp.float32
    tile, n = adj_ref.shape
    ein = e_ref.shape[1] // n

    mask = adj_ref[...].astype(f32)                             # [T, N]
    w_att = w_eattn_ref[...]                                    # [1, Ein]

    # attention scores; src runs dense along the lane axis.  The e_ft-dependent term
    # is Ein broadcast-FMA passes over lane-contiguous [T, N] slabs.
    s = s_src_ref[...] + s_dst_ref[...]                         # [T, N] (broadcast add)
    for f in range(ein):
        e_f = e_ref[:, pl.ds(f * n, n)].astype(f32)             # [T, N], 128-aligned slice
        s = s + w_att[0:1, f:f + 1] * e_f
    s = jnp.where(s >= 0, s, NEG_SLOPE * s)                     # leaky_relu

    # masked softmax over incoming edges (lane-axis reductions, EUP reciprocal)
    s = jnp.where(mask > 0, s, -1e30)
    m = jnp.max(s, axis=-1, keepdims=True)                      # [T, 1]
    p = jnp.exp(s - m) * mask
    denom = jnp.sum(p, axis=-1, keepdims=True)                  # [T, 1]
    # TODO(synk): a dst node with zero in-degree gives denom == 0 -> NaN here (the dense
    # reference does too); DGL would leave such nodes at fc_n(h).
    alpha = p * pl.reciprocal(denom, approx=True)               # [T, N]

    # z path fused through fc2: single MXU matmul with K = N_src.
    out = jnp.dot(alpha.astype(jnp.bfloat16), zw_ref[...],
                  preferred_element_type=f32)                   # [T, Dout_pad]

    # edge path: per-feature lane reduce + broadcast FMA (VPU/XLU; no K=8 matmul,
    # no [T, N, Ein] f32 broadcast intermediate).
    w2e = w2e_ref[...]                                          # [Ein, Dout_pad]
    for f in range(ein):
        e_f = e_ref[:, pl.ds(f * n, n)].astype(f32)             # [T, N]
        h_ef = jnp.sum(alpha * e_f, axis=-1, keepdims=True)     # [T, 1]
        out = out + h_ef * w2e[f:f + 1, :]                      # broadcast FMA

    out_ref[...] = out


def _pick_dst_tile(n, min_steps=4):
    # Largest MXU-friendly dst tile that still leaves >= min_steps grid steps, so the
    # auto-pipeliner has something to overlap (>= 2 steps per TensorCore on v7x).
    for t in (128, 64, 32, 16, 8):
        if n % t == 0 and n // t >= min_steps:
            return t
    for t in (128, 64, 32, 16, 8):
        if n % t == 0:
            return t
    return n


def node_level_gat(h, e_ft, adj_ds, w_n, w_e, w_a, w_2):
    """Pallas NodeLevelGAT forward on a dense (complete-graph style) adjacency."""
    n, _ = h.shape
    ein = e_ft.shape[-1]
    d = w_n.shape[1]
    de = w_e.shape[1]
    dout = w_2.shape[1]
    f32, bf16 = jnp.float32, jnp.bfloat16

    # --- grid-invariant preprocessing (tiny; plain XLA glue, hoisted out of the kernel) ---
    z = h.astype(f32) @ w_n.astype(f32)                         # fc_n           [N, D]
    a_src, a_eft, a_dst = w_a[:d], w_a[d:d + de], w_a[d + de:]
    s_src = (z @ a_src).reshape(1, n)                           # [1, N]  src score term
    s_dst = z @ a_dst                                           # [N, 1]  dst score term
    w_eattn = (w_e @ a_eft).reshape(1, ein)                     # [1, Ein] fc_e folded into attn
    w2_e = w_e @ w_2[d:]                                        # [Ein, Dout] fc_e folded into fc2

    # lane-pad fc2 output dim to a multiple of 128 -> unmasked full-width stores
    dout_pad = -(-dout // 128) * 128
    pad = dout_pad - dout
    zw = jnp.pad(z @ w_2[:d], ((0, 0), (0, pad)))               # fc2 z-path fused: z @ W2_z
    w2_e = jnp.pad(w2_e, ((0, 0), (0, pad)))                    # [Ein, Dout_pad] f32

    # bf16 for HBM-streamed / MXU operands (f32 accumulation inside the kernel);
    # edge tensor made src-minor and flattened so kernel slices are lane-contiguous.
    zw_bf = zw.astype(bf16)                                     # [N, Dout_pad]
    e_bf = e_ft.transpose(0, 2, 1).reshape(n, ein * n).astype(bf16)  # [N_dst, Ein*N_src]
    adj_bf = adj_ds.astype(bf16)                                # 0/1 mask -> exact in bf16

    tile = _pick_dst_tile(n)
    grid = (n // tile,)

    # VMEM budget derived from actual block footprint (x2 for double-buffering + headroom).
    block_bytes = (n * dout_pad * 2            # zw
                   + tile * ein * n * 2        # e tile
                   + tile * n * 2              # adjacency
                   + n * 4 + tile * 4          # s_src, s_dst
                   + ein * 4                   # w_eattn
                   + ein * dout_pad * 4        # folded fc2 edge weights
                   + tile * dout_pad * 4)      # output tile
    vmem_limit = min(64 * 1024 * 1024,
                     max(16 * 1024 * 1024, 2 * block_bytes + 4 * 1024 * 1024))

    # TODO(synk): for very large N (tens of thousands) add a second "arbitrary" grid axis
    # over source blocks with online-softmax accumulators so the e tile stays within
    # v7x's 64 MiB VMEM; not needed at these shapes.
    out = pl.pallas_call(
        _gat_kernel,
        out_shape=jax.ShapeDtypeStruct((n, dout_pad), f32),
        grid=grid,
        in_specs=[
            pl.BlockSpec((n, dout_pad), lambda i: (0, 0)),       # zw (all sources, resident)
            pl.BlockSpec((tile, ein * n), lambda i: (i, 0)),     # edge features (src-minor)
            pl.BlockSpec((tile, n), lambda i: (i, 0)),           # adjacency (dst-major)
            pl.BlockSpec((1, n), lambda i: (0, 0)),              # s_src
            pl.BlockSpec((tile, 1), lambda i: (i, 0)),           # s_dst
            pl.BlockSpec((1, ein), lambda i: (0, 0)),            # w_e @ a_eft
            pl.BlockSpec((ein, dout_pad), lambda i: (0, 0)),     # w_e @ fc2_e (padded)
        ],
        out_specs=pl.BlockSpec((tile, dout_pad), lambda i: (i, 0)),
        compiler_params=pltpu.CompilerParams(
            dimension_semantics=("parallel",),
            vmem_limit_bytes=vmem_limit,
        ),
    )(zw_bf, e_bf, adj_bf, s_src, s_dst, w_eattn, w2_e)
    return out[:, :dout]


def reference(h, e_ft, adj_ds, w_n, w_e, w_a, w_2):
    """Pure-JAX f32 reference mirroring the PyTorch/DGL forward on a dense graph."""
    d = w_n.shape[1]
    de = w_e.shape[1]
    z = h @ w_n                                             # fc_n
    ef = e_ft @ w_e                                         # fc_e, [N_dst, N_src, De]
    a_src, a_eft, a_dst = w_a[:d], w_a[d:d + de], w_a[d + de:]
    scores = ((z @ a_src)[None, :, 0]
              + (ef @ a_eft)[:, :, 0]
              + (z @ a_dst)[:, None, 0])                    # [dst, src]
    scores = jnp.where(scores >= 0, scores, NEG_SLOPE * scores)
    scores = jnp.where(adj_ds > 0, scores, -jnp.inf)
    alpha = jax.nn.softmax(scores, axis=1)
    h_z = alpha @ z
    h_e = jnp.einsum('ds,dse->de', alpha, ef)
    return jnp.concatenate([h_z, h_e], axis=1) @ w_2        # fc2


if __name__ == "__main__":
    key = jax.random.PRNGKey(0)
    k_h, k_e, k1, k2, k3, k4 = jax.random.split(key, 6)

    N = 256
    node_in_dim = 16
    edge_in_dim = 8
    edge_ft_out_dim = 8
    out_dim = 16

    h = jax.random.normal(k_h, (N, node_in_dim), jnp.float32)
    e_ft = jax.random.normal(k_e, (N, N, edge_in_dim), jnp.float32)   # [dst, src, feat]

    # Mostly-dense adjacency with some edges dropped; diagonal kept so every dst node
    # has at least one incoming edge (see TODO in the kernel re: zero in-degree).
    di = jnp.arange(N)[:, None]
    sj = jnp.arange(N)[None, :]
    adj_ds = jnp.where((di + sj) % 5 != 0, 1.0, 0.0).astype(jnp.float32)
    adj_ds = jnp.maximum(adj_ds, jnp.eye(N, dtype=jnp.float32))

    scale = 0.1
    w_n = scale * jax.random.normal(k1, (node_in_dim, out_dim), jnp.float32)
    w_e = scale * jax.random.normal(k2, (edge_in_dim, edge_ft_out_dim), jnp.float32)
    w_a = scale * jax.random.normal(k3, (out_dim + edge_ft_out_dim + out_dim, 1), jnp.float32)
    w_2 = scale * jax.random.normal(k4, (out_dim + edge_ft_out_dim, out_dim), jnp.float32)

    out = node_level_gat(h, e_ft, adj_ds, w_n, w_e, w_a, w_2)
    jax.block_until_ready(out)

    ref = reference(h, e_ft, adj_ds, w_n, w_e, w_a, w_2)
    np.testing.assert_allclose(np.asarray(out), np.asarray(ref), rtol=2e-2, atol=5e-3)
    print("KERNEL_OK")
</pallas_src>

<mosaic_0001>
module attributes {stable_mosaic.version = 11 : i64} {
  func.func @_gat_kernel(%arg0: i32, %arg1: memref<256x128xbf16, #tpu.memory_space<vmem>>, %arg2: memref<64x2048xbf16, #tpu.memory_space<vmem>>, %arg3: memref<64x256xbf16, #tpu.memory_space<vmem>>, %arg4: memref<1x256xf32, #tpu.memory_space<vmem>>, %arg5: memref<64x1xf32, #tpu.memory_space<vmem>>, %arg6: memref<1x8xf32, #tpu.memory_space<vmem>>, %arg7: memref<8x128xf32, #tpu.memory_space<vmem>>, %arg8: memref<64x128xf32, #tpu.memory_space<vmem>>) attributes {dimension_semantics = [#tpu.dimension_semantics<parallel>], iteration_bounds = array<i64: 4>, scalar_prefetch = 0 : i64, scratch_operands = 0 : i64, tpu.core_type = #tpu.core_type<tc>, window_params = [{pipeline_mode = #tpu.pipeline_mode<synchronous>, transform_indices = @transform_0, window_bounds = array<i64: 256, 128>}, {transform_indices = @transform_1, window_bounds = array<i64: 64, 2048>}, {transform_indices = @transform_2, window_bounds = array<i64: 64, 256>}, {pipeline_mode = #tpu.pipeline_mode<synchronous>, transform_indices = @transform_3, window_bounds = array<i64: 1, 256>}, {transform_indices = @transform_4, window_bounds = array<i64: 64, 1>}, {pipeline_mode = #tpu.pipeline_mode<synchronous>, transform_indices = @transform_5, window_bounds = array<i64: 1, 8>}, {pipeline_mode = #tpu.pipeline_mode<synchronous>, transform_indices = @transform_6, window_bounds = array<i64: 8, 128>}, {transform_indices = @transform_7, window_bounds = array<i64: 64, 128>}]} {
    %c0 = arith.constant 0 : index
    %c0_0 = arith.constant 0 : index
    %0 = vector.load %arg3[%c0, %c0_0] : memref<64x256xbf16, #tpu.memory_space<vmem>>, vector<64x256xbf16>
    %1 = arith.extf %0 : vector<64x256xbf16> to vector<64x256xf32>
    %c0_1 = arith.constant 0 : index
    %c0_2 = arith.constant 0 : index
    %2 = vector.load %arg6[%c0_1, %c0_2] : memref<1x8xf32, #tpu.memory_space<vmem>>, vector<1x8xf32>
    %c0_3 = arith.constant 0 : index
    %c0_4 = arith.constant 0 : index
    %3 = vector.load %arg4[%c0_3, %c0_4] : memref<1x256xf32, #tpu.memory_space<vmem>>, vector<1x256xf32>
    %c0_5 = arith.constant 0 : index
    %c0_6 = arith.constant 0 : index
    %4 = vector.load %arg5[%c0_5, %c0_6] : memref<64x1xf32, #tpu.memory_space<vmem>>, vector<64x1xf32>
    %5 = vector.broadcast %3 : vector<1x256xf32> to vector<64x256xf32>
    %6 = vector.broadcast %4 : vector<64x1xf32> to vector<64x256xf32>
    %7 = arith.addf %5, %6 : vector<64x256xf32>
    %c0_7 = arith.constant 0 : index
    %c0_8 = arith.constant 0 : index
    %8 = vector.load %arg2[%c0_7, %c0_8] : memref<64x2048xbf16, #tpu.memory_space<vmem>>, vector<64x256xbf16>
    %9 = arith.extf %8 : vector<64x256xbf16> to vector<64x256xf32>
    %10 = vector.extract_strided_slice %2 {offsets = [0, 0], sizes = [1, 1], strides = [1, 1]} : vector<1x8xf32> to vector<1x1xf32>
    %11 = vector.broadcast %10 : vector<1x1xf32> to vector<64x256xf32>
    %12 = arith.mulf %11, %9 : vector<64x256xf32>
    %13 = arith.addf %7, %12 : vector<64x256xf32>
    %c0_9 = arith.constant 0 : index
    %c256 = arith.constant 256 : index
    %14 = vector.load %arg2[%c0_9, %c256] : memref<64x2048xbf16, #tpu.memory_space<vmem>>, vector<64x256xbf16>
    %15 = arith.extf %14 : vector<64x256xbf16> to vector<64x256xf32>
    %16 = vector.extract_strided_slice %2 {offsets = [0, 1], sizes = [1, 1], strides = [1, 1]} : vector<1x8xf32> to vector<1x1xf32>
    %17 = vector.broadcast %16 : vector<1x1xf32> to vector<64x256xf32>
    %18 = arith.mulf %17, %15 : vector<64x256xf32>
    %19 = arith.addf %13, %18 : vector<64x256xf32>
    %c0_10 = arith.constant 0 : index
    %c512 = arith.constant 512 : index
    %20 = vector.load %arg2[%c0_10, %c512] : memref<64x2048xbf16, #tpu.memory_space<vmem>>, vector<64x256xbf16>
    %21 = arith.extf %20 : vector<64x256xbf16> to vector<64x256xf32>
    %22 = vector.extract_strided_slice %2 {offsets = [0, 2], sizes = [1, 1], strides = [1, 1]} : vector<1x8xf32> to vector<1x1xf32>
    %23 = vector.broadcast %22 : vector<1x1xf32> to vector<64x256xf32>
    %24 = arith.mulf %23, %21 : vector<64x256xf32>
    %25 = arith.addf %19, %24 : vector<64x256xf32>
    %c0_11 = arith.constant 0 : index
    %c768 = arith.constant 768 : index
    %26 = vector.load %arg2[%c0_11, %c768] : memref<64x2048xbf16, #tpu.memory_space<vmem>>, vector<64x256xbf16>
    %27 = arith.extf %26 : vector<64x256xbf16> to vector<64x256xf32>
    %28 = vector.extract_strided_slice %2 {offsets = [0, 3], sizes = [1, 1], strides = [1, 1]} : vector<1x8xf32> to vector<1x1xf32>
    %29 = vector.broadcast %28 : vector<1x1xf32> to vector<64x256xf32>
    %30 = arith.mulf %29, %27 : vector<64x256xf32>
    %31 = arith.addf %25, %30 : vector<64x256xf32>
    %c0_12 = arith.constant 0 : index
    %c1024 = arith.constant 1024 : index
    %32 = vector.load %arg2[%c0_12, %c1024] : memref<64x2048xbf16, #tpu.memory_space<vmem>>, vector<64x256xbf16>
    %33 = arith.extf %32 : vector<64x256xbf16> to vector<64x256xf32>
    %34 = vector.extract_strided_slice %2 {offsets = [0, 4], sizes = [1, 1], strides = [1, 1]} : vector<1x8xf32> to vector<1x1xf32>
    %35 = vector.broadcast %34 : vector<1x1xf32> to vector<64x256xf32>
    %36 = arith.mulf %35, %33 : vector<64x256xf32>
    %37 = arith.addf %31, %36 : vector<64x256xf32>
    %c0_13 = arith.constant 0 : index
    %c1280 = arith.constant 1280 : index
    %38 = vector.load %arg2[%c0_13, %c1280] : memref<64x2048xbf16, #tpu.memory_space<vmem>>, vector<64x256xbf16>
    %39 = arith.extf %38 : vector<64x256xbf16> to vector<64x256xf32>
    %40 = vector.extract_strided_slice %2 {offsets = [0, 5], sizes = [1, 1], strides = [1, 1]} : vector<1x8xf32> to vector<1x1xf32>
    %41 = vector.broadcast %40 : vector<1x1xf32> to vector<64x256xf32>
    %42 = arith.mulf %41, %39 : vector<64x256xf32>
    %43 = arith.addf %37, %42 : vector<64x256xf32>
    %c0_14 = arith.constant 0 : index
    %c1536 = arith.constant 1536 : index
    %44 = vector.load %arg2[%c0_14, %c1536] : memref<64x2048xbf16, #tpu.memory_space<vmem>>, vector<64x256xbf16>
    %45 = arith.extf %44 : vector<64x256xbf16> to vector<64x256xf32>
    %46 = vector.extract_strided_slice %2 {offsets = [0, 6], sizes = [1, 1], strides = [1, 1]} : vector<1x8xf32> to vector<1x1xf32>
    %47 = vector.broadcast %46 : vector<1x1xf32> to vector<64x256xf32>
    %48 = arith.mulf %47, %45 : vector<64x256xf32>
    %49 = arith.addf %43, %48 : vector<64x256xf32>
    %c0_15 = arith.constant 0 : index
    %c1792 = arith.constant 1792 : index
    %50 = vector.load %arg2[%c0_15, %c1792] : memref<64x2048xbf16, #tpu.memory_space<vmem>>, vector<64x256xbf16>
    %51 = arith.extf %50 : vector<64x256xbf16> to vector<64x256xf32>
    %52 = vector.extract_strided_slice %2 {offsets = [0, 7], sizes = [1, 1], strides = [1, 1]} : vector<1x8xf32> to vector<1x1xf32>
    %53 = vector.broadcast %52 : vector<1x1xf32> to vector<64x256xf32>
    %54 = arith.mulf %53, %51 : vector<64x256xf32>
    %55 = arith.addf %49, %54 : vector<64x256xf32>
    %cst = arith.constant 0.000000e+00 : f32
    %56 = vector.broadcast %cst : f32 to vector<64x256xf32>
    %57 = arith.cmpf oge, %55, %56 : vector<64x256xf32>
    %cst_16 = arith.constant 0.00999999977 : f32
    %58 = vector.broadcast %cst_16 : f32 to vector<64x256xf32>
    %59 = arith.mulf %58, %55 : vector<64x256xf32>
    %60 = arith.select %57, %55, %59 : vector<64x256xi1>, vector<64x256xf32>
    %cst_17 = arith.constant 0.000000e+00 : f32
    %61 = vector.broadcast %cst_17 : f32 to vector<64x256xf32>
    %62 = arith.cmpf ogt, %1, %61 : vector<64x256xf32>
    %cst_18 = arith.constant -1.000000e+30 : f32
    %63 = vector.broadcast %cst_18 : f32 to vector<64x256xf32>
    %64 = arith.select %62, %60, %63 : vector<64x256xi1>, vector<64x256xf32>
    %cst_19 = arith.constant dense<0xFF800000> : vector<64xf32>
    %65 = vector.multi_reduction <maximumf>, %64, %cst_19 [1] : vector<64x256xf32> to vector<64xf32>
    %66 = vector.shape_cast %65 : vector<64xf32> to vector<64x1xf32>
    %67 = vector.broadcast %66 : vector<64x1xf32> to vector<64x256xf32>
    %68 = arith.subf %64, %67 : vector<64x256xf32>
    %69 = math.exp %68 : vector<64x256xf32>
    %70 = arith.mulf %69, %1 : vector<64x256xf32>
    %cst_20 = arith.constant dense<0.000000e+00> : vector<64xf32>
    %71 = vector.multi_reduction <add>, %70, %cst_20 [1] : vector<64x256xf32> to vector<64xf32>
    %72 = vector.shape_cast %71 : vector<64xf32> to vector<64x1xf32>
    %73 = tpu.reciprocal %72 {approx = true} : vector<64x1xf32> -> vector<64x1xf32>
    %74 = vector.broadcast %73 : vector<64x1xf32> to vector<64x256xf32>
    %75 = arith.mulf %70, %74 : vector<64x256xf32>
    %76 = arith.truncf %75 : vector<64x256xf32> to vector<64x256xbf16>
    %c0_21 = arith.constant 0 : index
    %c0_22 = arith.constant 0 : index
    %77 = vector.load %arg1[%c0_21, %c0_22] : memref<256x128xbf16, #tpu.memory_space<vmem>>, vector<256x128xbf16>
    %cst_23 = arith.constant dense<0.000000e+00> : vector<64x128xf32>
    %78 = tpu.matmul %76, %77, %cst_23 {dimension_numbers = #tpu.dot_dimension_numbers<[1], [0], [0], [1], [0, 0, 1, 1], [], []>} : vector<64x256xbf16>, vector<256x128xbf16>, vector<64x128xf32> -> vector<64x128xf32>
    %c0_24 = arith.constant 0 : index
    %c0_25 = arith.constant 0 : index
    %79 = vector.load %arg7[%c0_24, %c0_25] : memref<8x128xf32, #tpu.memory_space<vmem>>, vector<8x128xf32>
    %c0_26 = arith.constant 0 : index
    %c0_27 = arith.constant 0 : index
    %80 = vector.load %arg2[%c0_26, %c0_27] : memref<64x2048xbf16, #tpu.memory_space<vmem>>, vector<64x256xbf16>
    %81 = arith.extf %80 : vector<64x256xbf16> to vector<64x256xf32>
    %82 = arith.mulf %75, %81 : vector<64x256xf32>
    %cst_28 = arith.constant dense<0.000000e+00> : vector<64xf32>
    %83 = vector.multi_reduction <add>, %82, %cst_28 [1] : vector<64x256xf32> to vector<64xf32>
    %84 = vector.shape_cast %83 : vector<64xf32> to vector<64x1xf32>
    %85 = vector.extract_strided_slice %79 {offsets = [0, 0], sizes = [1, 128], strides = [1, 1]} : vector<8x128xf32> to vector<1x128xf32>
    %86 = vector.broadcast %84 : vector<64x1xf32> to vector<64x128xf32>
    %87 = vector.broadcast %85 : vector<1x128xf32> to vector<64x128xf32>
    %88 = arith.mulf %86, %87 : vector<64x128xf32>
    %89 = arith.addf %78, %88 : vector<64x128xf32>
    %c0_29 = arith.constant 0 : index
    %c256_30 = arith.constant 256 : index
    %90 = vector.load %arg2[%c0_29, %c256_30] : memref<64x2048xbf16, #tpu.memory_space<vmem>>, vector<64x256xbf16>
    %91 = arith.extf %90 : vector<64x256xbf16> to vector<64x256xf32>
    %92 = arith.mulf %75, %91 : vector<64x256xf32>
    %cst_31 = arith.constant dense<0.000000e+00> : vector<64xf32>
    %93 = vector.multi_reduction <add>, %92, %cst_31 [1] : vector<64x256xf32> to vector<64xf32>
    %94 = vector.shape_cast %93 : vector<64xf32> to vector<64x1xf32>
    %95 = vector.extract_strided_slice %79 {offsets = [1, 0], sizes = [1, 128], strides = [1, 1]} : vector<8x128xf32> to vector<1x128xf32>
    %96 = vector.broadcast %94 : vector<64x1xf32> to vector<64x128xf32>
    %97 = vector.broadcast %95 : vector<1x128xf32> to vector<64x128xf32>
    %98 = arith.mulf %96, %97 : vector<64x128xf32>
    %99 = arith.addf %89, %98 : vector<64x128xf32>
    %c0_32 = arith.constant 0 : index
    %c512_33 = arith.constant 512 : index
    %100 = vector.load %arg2[%c0_32, %c512_33] : memref<64x2048xbf16, #tpu.memory_space<vmem>>, vector<64x256xbf16>
    %101 = arith.extf %100 : vector<64x256xbf16> to vector<64x256xf32>
    %102 = arith.mulf %75, %101 : vector<64x256xf32>
    %cst_34 = arith.constant dense<0.000000e+00> : vector<64xf32>
    %103 = vector.multi_reduction <add>, %102, %cst_34 [1] : vector<64x256xf32> to vector<64xf32>
    %104 = vector.shape_cast %103 : vector<64xf32> to vector<64x1xf32>
    %105 = vector.extract_strided_slice %79 {offsets = [2, 0], sizes = [1, 128], strides = [1, 1]} : vector<8x128xf32> to vector<1x128xf32>
    %106 = vector.broadcast %104 : vector<64x1xf32> to vector<64x128xf32>
    %107 = vector.broadcast %105 : vector<1x128xf32> to vector<64x128xf32>
    %108 = arith.mulf %106, %107 : vector<64x128xf32>
    %109 = arith.addf %99, %108 : vector<64x128xf32>
    %c0_35 = arith.constant 0 : index
    %c768_36 = arith.constant 768 : index
    %110 = vector.load %arg2[%c0_35, %c768_36] : memref<64x2048xbf16, #tpu.memory_space<vmem>>, vector<64x256xbf16>
    %111 = arith.extf %110 : vector<64x256xbf16> to vector<64x256xf32>
    %112 = arith.mulf %75, %111 : vector<64x256xf32>
    %cst_37 = arith.constant dense<0.000000e+00> : vector<64xf32>
    %113 = vector.multi_reduction <add>, %112, %cst_37 [1] : vector<64x256xf32> to vector<64xf32>
    %114 = vector.shape_cast %113 : vector<64xf32> to vector<64x1xf32>
    %115 = vector.extract_strided_slice %79 {offsets = [3, 0], sizes = [1, 128], strides = [1, 1]} : vector<8x128xf32> to vector<1x128xf32>
    %116 = vector.broadcast %114 : vector<64x1xf32> to vector<64x128xf32>
    %117 = vector.broadcast %115 : vector<1x128xf32> to vector<64x128xf32>
    %118 = arith.mulf %116, %117 : vector<64x128xf32>
    %119 = arith.addf %109, %118 : vector<64x128xf32>
    %c0_38 = arith.constant 0 : index
    %c1024_39 = arith.constant 1024 : index
    %120 = vector.load %arg2[%c0_38, %c1024_39] : memref<64x2048xbf16, #tpu.memory_space<vmem>>, vector<64x256xbf16>
    %121 = arith.extf %120 : vector<64x256xbf16> to vector<64x256xf32>
    %122 = arith.mulf %75, %121 : vector<64x256xf32>
    %cst_40 = arith.constant dense<0.000000e+00> : vector<64xf32>
    %123 = vector.multi_reduction <add>, %122, %cst_40 [1] : vector<64x256xf32> to vector<64xf32>
    %124 = vector.shape_cast %123 : vector<64xf32> to vector<64x1xf32>
    %125 = vector.extract_strided_slice %79 {offsets = [4, 0], sizes = [1, 128], strides = [1, 1]} : vector<8x128xf32> to vector<1x128xf32>
    %126 = vector.broadcast %124 : vector<64x1xf32> to vector<64x128xf32>
    %127 = vector.broadcast %125 : vector<1x128xf32> to vector<64x128xf32>
    %128 = arith.mulf %126, %127 : vector<64x128xf32>
    %129 = arith.addf %119, %128 : vector<64x128xf32>
    %c0_41 = arith.constant 0 : index
    %c1280_42 = arith.constant 1280 : index
    %130 = vector.load %arg2[%c0_41, %c1280_42] : memref<64x2048xbf16, #tpu.memory_space<vmem>>, vector<64x256xbf16>
    %131 = arith.extf %130 : vector<64x256xbf16> to vector<64x256xf32>
    %132 = arith.mulf %75, %131 : vector<64x256xf32>
    %cst_43 = arith.constant dense<0.000000e+00> : vector<64xf32>
    %133 = vector.multi_reduction <add>, %132, %cst_43 [1] : vector<64x256xf32> to vector<64xf32>
    %134 = vector.shape_cast %133 : vector<64xf32> to vector<64x1xf32>
    %135 = vector.extract_strided_slice %79 {offsets = [5, 0], sizes = [1, 128], strides = [1, 1]} : vector<8x128xf32> to vector<1x128xf32>
    %136 = vector.broadcast %134 : vector<64x1xf32> to vector<64x128xf32>
    %137 = vector.broadcast %135 : vector<1x128xf32> to vector<64x128xf32>
    %138 = arith.mulf %136, %137 : vector<64x128xf32>
    %139 = arith.addf %129, %138 : vector<64x128xf32>
    %c0_44 = arith.constant 0 : index
    %c1536_45 = arith.constant 1536 : index
    %140 = vector.load %arg2[%c0_44, %c1536_45] : memref<64x2048xbf16, #tpu.memory_space<vmem>>, vector<64x256xbf16>
    %141 = arith.extf %140 : vector<64x256xbf16> to vector<64x256xf32>
    %142 = arith.mulf %75, %141 : vector<64x256xf32>
    %cst_46 = arith.constant dense<0.000000e+00> : vector<64xf32>
    %143 = vector.multi_reduction <add>, %142, %cst_46 [1] : vector<64x256xf32> to vector<64xf32>
    %144 = vector.shape_cast %143 : vector<64xf32> to vector<64x1xf32>
    %145 = vector.extract_strided_slice %79 {offsets = [6, 0], sizes = [1, 128], strides = [1, 1]} : vector<8x128xf32> to vector<1x128xf32>
    %146 = vector.broadcast %144 : vector<64x1xf32> to vector<64x128xf32>
    %147 = vector.broadcast %145 : vector<1x128xf32> to vector<64x128xf32>
    %148 = arith.mulf %146, %147 : vector<64x128xf32>
    %149 = arith.addf %139, %148 : vector<64x128xf32>
    %c0_47 = arith.constant 0 : index
    %c1792_48 = arith.constant 1792 : index
    %150 = vector.load %arg2[%c0_47, %c1792_48] : memref<64x2048xbf16, #tpu.memory_space<vmem>>, vector<64x256xbf16>
    %151 = arith.extf %150 : vector<64x256xbf16> to vector<64x256xf32>
    %152 = arith.mulf %75, %151 : vector<64x256xf32>
    %cst_49 = arith.constant dense<0.000000e+00> : vector<64xf32>
    %153 = vector.multi_reduction <add>, %152, %cst_49 [1] : vector<64x256xf32> to vector<64xf32>
    %154 = vector.shape_cast %153 : vector<64xf32> to vector<64x1xf32>
    %155 = vector.extract_strided_slice %79 {offsets = [7, 0], sizes = [1, 128], strides = [1, 1]} : vector<8x128xf32> to vector<1x128xf32>
    %156 = vector.broadcast %154 : vector<64x1xf32> to vector<64x128xf32>
    %157 = vector.broadcast %155 : vector<1x128xf32> to vector<64x128xf32>
    %158 = arith.mulf %156, %157 : vector<64x128xf32>
    %159 = arith.addf %149, %158 : vector<64x128xf32>
    %c0_50 = arith.constant 0 : index
    %c0_51 = arith.constant 0 : index
    %160 = vector.load %arg8[%c0_50, %c0_51] : memref<64x128xf32, #tpu.memory_space<vmem>>, vector<64x128xf32>
    tpu.vector_store %arg8[%c0_50, %c0_51], %159 {strides = array<i32>} : memref<64x128xf32, #tpu.memory_space<vmem>>, vector<64x128xf32>,
    return
  }
  func.func @transform_0(%arg0: i32) -> (i32, i32) {
    %c0_i32 = arith.constant 0 : i32
    %c0_i32_0 = arith.constant 0 : i32
    %c0_i32_1 = arith.constant 0 : i32
    return %c0_i32, %c0_i32_0 : i32, i32
  }
  func.func @transform_1(%arg0: i32) -> (i32, i32) {
    %c0_i32 = arith.constant 0 : i32
    %c0_i32_0 = arith.constant 0 : i32
    return %arg0, %c0_i32 : i32, i32
  }
  func.func @transform_2(%arg0: i32) -> (i32, i32) {
    %c0_i32 = arith.constant 0 : i32
    %c0_i32_0 = arith.constant 0 : i32
    return %arg0, %c0_i32 : i32, i32
  }
  func.func @transform_3(%arg0: i32) -> (i32, i32) {
    %c0_i32 = arith.constant 0 : i32
    %c0_i32_0 = arith.constant 0 : i32
    %c0_i32_1 = arith.constant 0 : i32
    return %c0_i32, %c0_i32_0 : i32, i32
  }
  func.func @transform_4(%arg0: i32) -> (i32, i32) {
    %c0_i32 = arith.constant 0 : i32
    %c0_i32_0 = arith.constant 0 : i32
    return %arg0, %c0_i32 : i32, i32
  }
  func.func @transform_5(%arg0: i32) -> (i32, i32) {
    %c0_i32 = arith.constant 0 : i32
    %c0_i32_0 = arith.constant 0 : i32
    %c0_i32_1 = arith.constant 0 : i32
    return %c0_i32, %c0_i32_0 : i32, i32
  }
  func.func @transform_6(%arg0: i32) -> (i32, i32) {
    %c0_i32 = arith.constant 0 : i32
    %c0_i32_0 = arith.constant 0 : i32
    %c0_i32_1 = arith.constant 0 : i32
    return %c0_i32, %c0_i32_0 : i32, i32
  }
  func.func @transform_7(%arg0: i32) -> (i32, i32) {
    %c0_i32 = arith.constant 0 : i32
    %c0_i32_0 = arith.constant 0 : i32
    return %arg0, %c0_i32 : i32, i32
  }
}

</mosaic_0001>

<llo_original>
// kernel: tpu_custom_call.1
$region0: #{tpu_custom_call.1}
  #allocation0 [shape = 'u32[]', space=smem, size = 0x4, offset = 0x4, fixed_abs, tag = 'smem constant byte address 0x4 - core index']
  #allocation1 [shape = 'u32[144,128]{1,0:T(1,128)}', space=vmem, size = 0x12000, scoped, tag = 'internal scratch']
  %s0 = inlined_call_operand.hbm [shape: bf16[256,128], index: 0, kind: input, shape index: {}]
  %s1 = inlined_call_operand.hbm [shape: bf16[256,2048], index: 1, kind: input, shape index: {}]
  %s2 = inlined_call_operand.vmem [shape: bf16[256,256], index: 2, kind: input, shape index: {}]
  %s3 = inlined_call_operand.vmem [shape: f32[1,256], index: 3, kind: input, shape index: {}]
  %s4 = inlined_call_operand.vmem [shape: f32[256,1], index: 4, kind: input, shape index: {}]
  %s5 = inlined_call_operand.vmem [shape: f32[1,8], index: 5, kind: input, shape index: {}]
  %s6 = inlined_call_operand.vmem [shape: f32[8,128], index: 6, kind: input, shape index: {}]
  %s7 = inlined_call_operand.hbm [shape: f32[256,128], index: 7, kind: output, shape index: {}]
  %s8 = sld [smem:[#allocation0]]
  $region69: #{tpu_custom_call.1} parent=0
    _
  %s10 = ssub.s32 1, %s8
  %s11 = scalar_select 0, %s10, %s8
  $region1: #{tpu_custom_call.1} parent=0
    #allocation2 [shape = 'u8[65536]{0}', space=vmem, size = 0x10000, scoped, tag = 'input window, operand 0, single buffered']
    #allocation3 [shape = 's32[2]{0}', space=sflag, size = 0x8, scoped, tag = 'scoped memory for tpu_custom_call.1']
    #allocation4 [shape = 's32[2]{0}', space=sflag, size = 0x8, scoped, tag = 'scoped memory for tpu_custom_call.1']
    #allocation5 [shape = 'u8[524288]{0}', space=vmem, size = 0x80000, scoped, tag = 'input window, operand 1']
    #allocation6 [shape = 's32[2]{0}', space=sflag, size = 0x8, scoped, tag = 'scoped memory for tpu_custom_call.1']
    #allocation7 [shape = 'u8[65536]{0}', space=vmem, size = 0x10000, scoped, tag = 'output window, operand 0']
    %12 = vsyncpa [#allocation3], 0
    %13 = vsyncpa [#allocation6], 0
    %s14 = scalar_lea.sflag [#allocation6], 1
    %15 = vsyncpa %s14, 0
    %16 = vsyncpa [#allocation4], 0
    %s17 = scalar_lea.sflag [#allocation4], 1
    %18 = vsyncpa %s17, 0
    loop: start=0, step=1, limit=6
    $region2: #{tpu_custom_call.1} parent=1 // loop_pre_header
      _
    $region3: #{tpu_custom_call.1} parent=1 // loop_header
      %s20 = sphi 0, %s24
      %p21 = scmp.ge.s32.totalorder %s20, 6
      %s28 = sphi 0, %s28
      %s30 = sphi 0, %s28
      %s31 = sphi 0, %s30
      %s45 = sphi 0, %s31
      %s51 = sphi 0, %s53
      %s54 = sphi 0, %s51
      %s55 = sphi 0, %s54
      %s71 = sphi 0, %s55
      %s77 = sphi 0, %s79
      %s80 = sphi 0, %s77
      %s81 = sphi 0, %s80
      %s97 = sphi 0, %s81
      %s101 = sphi 0, %s101
      %s103 = sphi 0, %s101
      %s104 = sphi 0, %s103
      %s118 = sphi 0, %s104
      %s124 = sphi 0, %s126
      %s127 = sphi 0, %s124
      %s128 = sphi 0, %s127
      %s144 = sphi 0, %s128
      %s148 = sphi 0, %s148
      %s150 = sphi 0, %s148
      %s151 = sphi 0, %s150
      %s165 = sphi 0, %s151
      %s169 = sphi 0, %s169
      %s171 = sphi 0, %s169
      %s172 = sphi 0, %s171
      %s186 = sphi 0, %s172
      %s192 = sphi 0, %s194
      %s195 = sphi 0, %s192
      %s196 = sphi 0, %s195
      %s212 = sphi 0, %s196
    $region4: #{tpu_custom_call.1} parent=1 // loop_header_branch
      %23 = sbr.rel (%p21) target = $region8
    $region5: #{tpu_custom_call.1} parent=1 // loop_body
      %s25 = ssub.s32 %s20, 1
      %s26 = ssub.s32 %s20, 2
      %s27 = sadd.s32 %s20, 1
      %s29 = sadd.s32 %s28, 1
      %p32 = scmp.eq.s32.totalorder %s20, 3
      %p33 = scmp.ne.s32.totalorder %s28, %s30
      %p34 = scmp.eq.s32.totalorder %s20, 0
      %p35 = por %p33, %p34
      %p36 = scmp.ne.s32.totalorder %s28, %s30
      %p37 = scmp.eq.s32.totalorder %s25, 3
      %p38 = por %p36, %p37
      %p39 = scmp.ne.s32.totalorder %s30, %s31
      %p40 = scmp.eq.s32.totalorder %s25, 0
      %p41 = por %p39, %p40
      %p42 = scmp.ne.s32.totalorder %s30, %s31
      %p43 = scmp.eq.s32.totalorder %s26, 3
      %p44 = por %p42, %p43
      %p46 = scmp.ne.s32.totalorder %s31, %s45
      %p47 = scmp.eq.s32.totalorder %s26, 0
      %p48 = por %p46, %p47
      %s49 = ssub.s32 %s20, %s27
      %p50 = scmp.eq.s32.totalorder %s49, 0
      %s52 = sadd.s32 %s51, 1
      %s53 = scalar_select %p50, %s51, %s52
      %p56 = pneg %p50
      %p57 = scmp.eq.s32.totalorder %s20, 3
      %p58 = por %p56, %p57
      %p59 = scmp.ne.s32.totalorder %s51, %s54
      %p60 = scmp.eq.s32.totalorder %s20, 0
      %p61 = por %p59, %p60
      %p62 = scmp.ne.s32.totalorder %s51, %s54
      %p63 = scmp.eq.s32.totalorder %s25, 3
      %p64 = por %p62, %p63
      %p65 = scmp.ne.s32.totalorder %s54, %s55
      %p66 = scmp.eq.s32.totalorder %s25, 0
      %p67 = por %p65, %p66
      %p68 = scmp.ne.s32.totalorder %s54, %s55
      %p69 = scmp.eq.s32.totalorder %s26, 3
      %p70 = por %p68, %p69
      %p72 = scmp.ne.s32.totalorder %s55, %s71
      %p73 = scmp.eq.s32.totalorder %s26, 0
      %p74 = por %p72, %p73
      %s75 = ssub.s32 %s20, %s27
      %p76 = scmp.eq.s32.totalorder %s75, 0
      %s78 = sadd.s32 %s77, 1
      %s79 = scalar_select %p76, %s77, %s78
      %p82 = pneg %p76
      %p83 = scmp.eq.s32.totalorder %s20, 3
      %p84 = por %p82, %p83
      %p85 = scmp.ne.s32.totalorder %s77, %s80
      %p86 = scmp.eq.s32.totalorder %s20, 0
      %p87 = por %p85, %p86
      %p88 = scmp.ne.s32.totalorder %s77, %s80
      %p89 = scmp.eq.s32.totalorder %s25, 3
      %p90 = por %p88, %p89
      %p91 = scmp.ne.s32.totalorder %s80, %s81
      %p92 = scmp.eq.s32.totalorder %s25, 0
      %p93 = por %p91, %p92
      %p94 = scmp.ne.s32.totalorder %s80, %s81
      %p95 = scmp.eq.s32.totalorder %s26, 3
      %p96 = por %p94, %p95
      %p98 = scmp.ne.s32.totalorder %s81, %s97
      %p99 = scmp.eq.s32.totalorder %s26, 0
      %p100 = por %p98, %p99
      %s102 = sadd.s32 %s101, 1
      %p105 = scmp.eq.s32.totalorder %s20, 3
      %p106 = scmp.ne.s32.totalorder %s101, %s103
      %p107 = scmp.eq.s32.totalorder %s20, 0
      %p108 = por %p106, %p107
      %p109 = scmp.ne.s32.totalorder %s101, %s103
      %p110 = scmp.eq.s32.totalorder %s25, 3
      %p111 = por %p109, %p110
      %p112 = scmp.ne.s32.totalorder %s103, %s104
      %p113 = scmp.eq.s32.totalorder %s25, 0
      %p114 = por %p112, %p113
      %p115 = scmp.ne.s32.totalorder %s103, %s104
      %p116 = scmp.eq.s32.totalorder %s26, 3
      %p117 = por %p115, %p116
      %p119 = scmp.ne.s32.totalorder %s104, %s118
      %p120 = scmp.eq.s32.totalorder %s26, 0
      %p121 = por %p119, %p120
      %s122 = ssub.s32 %s20, %s27
      %p123 = scmp.eq.s32.totalorder %s122, 0
      %s125 = sadd.s32 %s124, 1
      %s126 = scalar_select %p123, %s124, %s125
      %p129 = pneg %p123
      %p130 = scmp.eq.s32.totalorder %s20, 3
      %p131 = por %p129, %p130
      %p132 = scmp.ne.s32.totalorder %s124, %s127
      %p133 = scmp.eq.s32.totalorder %s20, 0
      %p134 = por %p132, %p133
      %p135 = scmp.ne.s32.totalorder %s124, %s127
      %p136 = scmp.eq.s32.totalorder %s25, 3
      %p137 = por %p135, %p136
      %p138 = scmp.ne.s32.totalorder %s127, %s128
      %p139 = scmp.eq.s32.totalorder %s25, 0
      %p140 = por %p138, %p139
      %p141 = scmp.ne.s32.totalorder %s127, %s128
      %p142 = scmp.eq.s32.totalorder %s26, 3
      %p143 = por %p141, %p142
      %p145 = scmp.ne.s32.totalorder %s128, %s144
      %p146 = scmp.eq.s32.totalorder %s26, 0
      %p147 = por %p145, %p146
      %s149 = sadd.s32 %s148, 1
      %p152 = scmp.eq.s32.totalorder %s20, 3
      %p153 = scmp.ne.s32.totalorder %s148, %s150
      %p154 = scmp.eq.s32.totalorder %s20, 0
      %p155 = por %p153, %p154
      %p156 = scmp.ne.s32.totalorder %s148, %s150
      %p157 = scmp.eq.s32.totalorder %s25, 3
      %p158 = por %p156, %p157
      %p159 = scmp.ne.s32.totalorder %s150, %s151
      %p160 = scmp.eq.s32.totalorder %s25, 0
      %p161 = por %p159, %p160
      %p162 = scmp.ne.s32.totalorder %s150, %s151
      %p163 = scmp.eq.s32.totalorder %s26, 3
      %p164 = por %p162, %p163
      %p166 = scmp.ne.s32.totalorder %s151, %s165
      %p167 = scmp.eq.s32.totalorder %s26, 0
      %p168 = por %p166, %p167
      %s170 = sadd.s32 %s169, 1
      %p173 = scmp.eq.s32.totalorder %s20, 3
      %p174 = scmp.ne.s32.totalorder %s169, %s171
      %p175 = scmp.eq.s32.totalorder %s20, 0
      %p176 = por %p174, %p175
      %p177 = scmp.ne.s32.totalorder %s169, %s171
      %p178 = scmp.eq.s32.totalorder %s25, 3
      %p179 = por %p177, %p178
      %p180 = scmp.ne.s32.totalorder %s171, %s172
      %p181 = scmp.eq.s32.totalorder %s25, 0
      %p182 = por %p180, %p181
      %p183 = scmp.ne.s32.totalorder %s171, %s172
      %p184 = scmp.eq.s32.totalorder %s26, 3
      %p185 = por %p183, %p184
      %p187 = scmp.ne.s32.totalorder %s172, %s186
      %p188 = scmp.eq.s32.totalorder %s26, 0
      %p189 = por %p187, %p188
      %s190 = ssub.s32 %s20, %s27
      %p191 = scmp.eq.s32.totalorder %s190, 0
      %s193 = sadd.s32 %s192, 1
      %s194 = scalar_select %p191, %s192, %s193
      %p197 = pneg %p191
      %p198 = scmp.eq.s32.totalorder %s20, 3
      %p199 = por %p197, %p198
      %p200 = scmp.ne.s32.totalorder %s192, %s195
      %p201 = scmp.eq.s32.totalorder %s20, 0
      %p202 = por %p200, %p201
      %p203 = scmp.ne.s32.totalorder %s192, %s195
      %p204 = scmp.eq.s32.totalorder %s25, 3
      %p205 = por %p203, %p204
      %p206 = scmp.ne.s32.totalorder %s195, %s196
      %p207 = scmp.eq.s32.totalorder %s25, 0
      %p208 = por %p206, %p207
      %p209 = scmp.ne.s32.totalorder %s195, %s196
      %p210 = scmp.eq.s32.totalorder %s26, 3
      %p211 = por %p209, %p210
      %p213 = scmp.ne.s32.totalorder %s196, %s212
      %p214 = scmp.eq.s32.totalorder %s26, 0
      %p215 = por %p213, %p214
      %p216 = scmp.le.s32.totalorder 1, %s20
      %p217 = scmp.lt.s32.totalorder %s20, 5
      %p218 = pnand %p216, %p217
      %p219 = pneg %p218
      // Predicated region
      $region9: #{tpu_custom_call.1} parent=5 // pred_check
        _
      $region10: #{tpu_custom_call.1} parent=5 // pred_check_branch
        %221 = sbr.rel (%p218) target = $region12
      $region11: #{tpu_custom_call.1} parent=5 // pred_region
        %s222 = ssub.s32 %s20, 1
        // Predicated region
        $region13: #{tpu_custom_call.1} parent=11 // pred_check
          %p223 = pneg %p41
        $region14: #{tpu_custom_call.1} parent=11 // pred_check_branch
          %225 = sbr.rel (%p223) target = $region16
        $region15: #{tpu_custom_call.1} parent=11 // pred_region
          %s227 = ssub.s32 2048, 2048
          %228 = vsyncadd [#allocation3], %s227
          %s229 = sshll.u32 [#allocation2], 4
          %s230 = int_to_ptr.vmem [resolvable:$true] %s229
          %235 = dma.hbm_to_vmem [thread:$0]  %s0, 2048, %s230, [#allocation3], 64, 64, 4
        $region16: #{tpu_custom_call.1} parent=11 // pred_fallthru
          _
        // Predicated region
        $region17: #{tpu_custom_call.1} parent=11 // pred_check
          %p236 = pneg %p114
        $region18: #{tpu_custom_call.1} parent=11 // pred_check_branch
          %238 = sbr.rel (%p236) target = $region20
        $region19: #{tpu_custom_call.1} parent=11 // pred_region
          _
        $region20: #{tpu_custom_call.1} parent=11 // pred_fallthru
          _
        // Predicated region
        $region21: #{tpu_custom_call.1} parent=11 // pred_check
          %p239 = pneg %p161
        $region22: #{tpu_custom_call.1} parent=11 // pred_check_branch
          %241 = sbr.rel (%p239) target = $region24
        $region23: #{tpu_custom_call.1} parent=11 // pred_region
          _
        $region24: #{tpu_custom_call.1} parent=11 // pred_fallthru
          _
        // Predicated region
        $region25: #{tpu_custom_call.1} parent=11 // pred_check
          %p242 = pneg %p182
        $region26: #{tpu_custom_call.1} parent=11 // pred_check_branch
          %244 = sbr.rel (%p242) target = $region28
        $region27: #{tpu_custom_call.1} parent=11 // pred_region
          _
        $region28: #{tpu_custom_call.1} parent=11 // pred_fallthru
          _
      $region12: #{tpu_custom_call.1} parent=5 // pred_fallthru
        _
      %p245 = scmp.lt.s32.totalorder %s20, 4
      // Predicated region
      $region29: #{tpu_custom_call.1} parent=5 // pred_check
        %p246 = pneg %p245
      $region30: #{tpu_custom_call.1} parent=5 // pred_check_branch
        %248 = sbr.rel (%p246) target = $region32
      $region31: #{tpu_custom_call.1} parent=5 // pred_region
        // Predicated region
        $region33: #{tpu_custom_call.1} parent=31 // pred_check
          %p249 = pneg %p61
        $region34: #{tpu_custom_call.1} parent=31 // pred_check_branch
          %251 = sbr.rel (%p249) target = $region36
        $region35: #{tpu_custom_call.1} parent=31 // pred_region
          %s252 = sand.u32 %s51, 1
          %s253 = scalar_lea.sflag [#allocation6], %s252
          %s254 = sand.u32 %s51, 1
          %s255 = smul.addr %s254, 512
          %s256 = scalar_lea.vmem [#allocation5], %s255
          %s257 = smul.u32 8, %s20
          %s259 = ssub.s32 8192, 8192
          %260 = vsyncadd %s253, %s259
          %s261 = smul.addr %s257, 16
          %s262 = smul.addr %s261, 64
          %s263 = scalar_lea.hbm %s1, %s262
          %s264 = sshll.u32 %s256, 4
          %s265 = int_to_ptr.vmem [resolvable:$true] %s264
          %270 = dma.hbm_to_vmem [thread:$0]  %s263, 8192, %s265, %s253, 1024, 1024, 64
        $region36: #{tpu_custom_call.1} parent=31 // pred_fallthru
          _
        // Predicated region
        $region37: #{tpu_custom_call.1} parent=31 // pred_check
          %p271 = pneg %p87
        $region38: #{tpu_custom_call.1} parent=31 // pred_check_branch
          %273 = sbr.rel (%p271) target = $region40
        $region39: #{tpu_custom_call.1} parent=31 // pred_region
          %s274 = smul.u32 8, %s20
          %p275 = scmp.lt.s32.totalorder %s274, 31
          %s276 = scalar_select %p275, %s274, 31
          %s277 = smul.addr %s276, 2
          %s278 = smul.addr %s277, 4
          %s279 = scalar_lea.vmem %s2, %s278
          %s280 = smul.u32 8, %s20
        $region40: #{tpu_custom_call.1} parent=31 // pred_fallthru
          _
        // Predicated region
        $region41: #{tpu_custom_call.1} parent=31 // pred_check
          %p281 = pneg %p134
        $region42: #{tpu_custom_call.1} parent=31 // pred_check_branch
          %283 = sbr.rel (%p281) target = $region44
        $region43: #{tpu_custom_call.1} parent=31 // pred_region
          %s284 = smul.u32 8, %s20
          %p285 = scmp.lt.s32.totalorder %s284, 31
          %s286 = scalar_select %p285, %s284, 31
          %s287 = smul.addr %s286, 8
          %s288 = scalar_lea.vmem %s4, %s287
          %s289 = smul.u32 8, %s20
        $region44: #{tpu_custom_call.1} parent=31 // pred_fallthru
          _
      $region32: #{tpu_custom_call.1} parent=5 // pred_fallthru
        _
      %p290 = scmp.le.s32.totalorder 1, %s20
      %p291 = scmp.lt.s32.totalorder %s20, 5
      %p292 = pnand %p290, %p291
      %p293 = pneg %p292
      // Predicated region
      $region45: #{tpu_custom_call.1} parent=5 // pred_check
        _
      $region46: #{tpu_custom_call.1} parent=5 // pred_check_branch
        %295 = sbr.rel (%p292) target = $region48
      $region47: #{tpu_custom_call.1} parent=5 // pred_region
        %s296 = ssub.s32 %s20, 1
        // Predicated region
        $region49: #{tpu_custom_call.1} parent=47 // pred_check
          %p297 = pneg %p41
        $region50: #{tpu_custom_call.1} parent=47 // pred_check_branch
          %299 = sbr.rel (%p297) target = $region52
        $region51: #{tpu_custom_call.1} parent=47 // pred_region
          %300 = dma.done [#allocation3], 2048
        $region52: #{tpu_custom_call.1} parent=47 // pred_fallthru
          _
        %s301 = sand.u32 %s54, 1
        %s302 = scalar_lea.sflag [#allocation6], %s301
        %s303 = sand.u32 %s54, 1
        %s304 = smul.addr %s303, 512
        %s305 = scalar_lea.vmem [#allocation5], %s304
        // Predicated region
        $region53: #{tpu_custom_call.1} parent=47 // pred_check
          %p306 = pneg %p67
        $region54: #{tpu_custom_call.1} parent=47 // pred_check_branch
          %308 = sbr.rel (%p306) target = $region56
        $region55: #{tpu_custom_call.1} parent=47 // pred_region
          %309 = dma.done %s302, 8192
        $region56: #{tpu_custom_call.1} parent=47 // pred_fallthru
          _
        %p310 = pneg %p41
        %p311 = pneg %p38
        %s312 = sand.u32 %s54, 1
        %s313 = scalar_lea.sflag [#allocation6], %s312
        %s314 = sand.u32 %s54, 1
        %s315 = smul.addr %s314, 512
        %s316 = scalar_lea.vmem [#allocation5], %s315
        %p317 = pneg %p67
        %p318 = pneg %p64
        %s319 = smul.u32 8, %s25
        %p320 = scmp.lt.s32.totalorder %s319, 31
        %s321 = scalar_select %p320, %s319, 31
        %s322 = smul.addr %s321, 2
        %s323 = smul.addr %s322, 4
        %s324 = scalar_lea.vmem %s2, %s323
        %p325 = pneg %p93
        %p326 = pneg %p90
        %p327 = pneg %p114
        %p328 = pneg %p111
        %s329 = smul.u32 8, %s25
        %p330 = scmp.lt.s32.totalorder %s329, 31
        %s331 = scalar_select %p330, %s329, 31
        %s332 = smul.addr %s331, 8
        %s333 = scalar_lea.vmem %s4, %s332
        %p334 = pneg %p140
        %p335 = pneg %p137
        %p336 = pneg %p161
        %p337 = pneg %p158
        %p338 = pneg %p182
        %p339 = pneg %p179
        %p340 = pneg %p208
        %p341 = pneg %p205
        %s342 = sand.u32 %s195, 1
        %s343 = scalar_lea.sflag [#allocation4], %s342
        %s344 = sand.u32 %s195, 1
        %s345 = smul.addr %s344, 64
        %s346 = scalar_lea.vmem [#allocation7], %s345
        %s347 = smul.u32 8, %s25
        %s348 = smul.u32 8, %s25
        %p349 = scmp.lt.s32.totalorder %s348, 31
        %s350 = scalar_select %p349, %s348, 31
        %s351 = smul.addr %s350, 2
        %s352 = smul.addr %s351, 4
        %s353 = scalar_lea.vmem %s2, %s352
        %s354 = smul.u32 8, %s25
        %s355 = smul.u32 8, %s25
        %p356 = scmp.lt.s32.totalorder %s355, 31
        %s357 = scalar_select %p356, %s355, 31
        %s358 = smul.addr %s357, 8
        %s359 = scalar_lea.vmem %s4, %s358
        %s360 = smul.u32 8, %s25
        %s361 = smul.u32 8, %s25
        %v363 = vld [vmem:[%s353] sm:$0xff]
        %v364 = vld [vmem:[%s353 + $0x8] sm:$0xff]
        %v365 = vld [vmem:[%s353 + $0x10] sm:$0xff]
        %v366 = vld [vmem:[%s353 + $0x18] sm:$0xff]
        %v367 = vld [vmem:[%s353 + $0x20] sm:$0xff]
        %v368 = vld [vmem:[%s353 + $0x28] sm:$0xff]
        %v369 = vld [vmem:[%s353 + $0x30] sm:$0xff]
        %v370 = vld [vmem:[%s353 + $0x38] sm:$0xff]
        %v371 = vunpack.c.l.bf16 %v363
        %v372 = vunpack.c.h.bf16 %v363
        %v373 = vunpack.c.l.bf16 %v364
        %v374 = vunpack.c.h.bf16 %v364
        %v375 = vunpack.c.l.bf16 %v365
        %v376 = vunpack.c.h.bf16 %v365
        %v377 = vunpack.c.l.bf16 %v366
        %v378 = vunpack.c.h.bf16 %v366
        %v379 = vunpack.c.l.bf16 %v367
        %v380 = vunpack.c.h.bf16 %v367
        %v381 = vunpack.c.l.bf16 %v368
        %v382 = vunpack.c.h.bf16 %v368
        %v383 = vunpack.c.l.bf16 %v369
        %v384 = vunpack.c.h.bf16 %v369
        %v385 = vunpack.c.l.bf16 %v370
        %v386 = vunpack.c.h.bf16 %v370
        %v387 = vld [vmem:[%s5] sm:$0x1]
        %v388 = vld [vmem:[%s3] sm:$0x3]
        %v389 = vld [vmem:[%s359] sm:$0xff]
        %v390 = vld [vmem:[%s359 + $0x8] sm:$0xff]
        %v391 = vld [vmem:[%s359 + $0x10] sm:$0xff]
        %v392 = vld [vmem:[%s359 + $0x18] sm:$0xff]
        %v393 = vld [vmem:[%s359 + $0x20] sm:$0xff]
        %v394 = vld [vmem:[%s359 + $0x28] sm:$0xff]
        %v395 = vld [vmem:[%s359 + $0x30] sm:$0xff]
        %v396 = vld [vmem:[%s359 + $0x38] sm:$0xff]
        %v398 = vlaneseq
        %v399 = vshrl.u32 %v398, 7
        %v400 = vsub.s32 0, %v399
        %v401 = vrot.slane %v388, %v400
        %v402 = vlaneseq
        %v403 = vshrl.u32 %v402, 7
        %v404 = vsub.s32 1, %v403
        %v405 = vrot.slane %v388, %v404
        %409 = vset.pattern.permute.xlu0 0
        %410 = vperm.xlu0 %409, %v389
        %v411 = vpop.permute.xlu0 %410
        %414 = vset.pattern.permute.xlu0 0
        %415 = vperm.xlu0 %414, %v390
        %v416 = vpop.permute.xlu0 %415
        %419 = vset.pattern.permute.xlu0 0
        %420 = vperm.xlu0 %419, %v391
        %v421 = vpop.permute.xlu0 %420
        %424 = vset.pattern.permute.xlu0 0
        %425 = vperm.xlu0 %424, %v392
        %v426 = vpop.permute.xlu0 %425
        %429 = vset.pattern.permute.xlu0 0
        %430 = vperm.xlu0 %429, %v393
        %v431 = vpop.permute.xlu0 %430
        %434 = vset.pattern.permute.xlu0 0
        %435 = vperm.xlu0 %434, %v394
        %v436 = vpop.permute.xlu0 %435
        %439 = vset.pattern.permute.xlu0 0
        %440 = vperm.xlu0 %439, %v395
        %v441 = vpop.permute.xlu0 %440
        %444 = vset.pattern.permute.xlu0 0
        %445 = vperm.xlu0 %444, %v396
        %v446 = vpop.permute.xlu0 %445
        %v448 = vadd.f32 %v401, %v411
        %v449 = vadd.f32 %v405, %v411
        %v450 = vadd.f32 %v401, %v416
        %v451 = vadd.f32 %v405, %v416
        %v452 = vadd.f32 %v401, %v421
        %v453 = vadd.f32 %v405, %v421
        %v454 = vadd.f32 %v401, %v426
        %v455 = vadd.f32 %v405, %v426
        %v456 = vadd.f32 %v401, %v431
        %v457 = vadd.f32 %v405, %v431
        %v458 = vadd.f32 %v401, %v436
        %v459 = vadd.f32 %v405, %v436
        %v460 = vadd.f32 %v401, %v441
        %v461 = vadd.f32 %v405, %v441
        %v462 = vadd.f32 %v401, %v446
        %v463 = vadd.f32 %v405, %v446
        %v464 = vld [vmem:[%s305] sm:$0xff]
        %v465 = vld [vmem:[%s305 + $0x40] sm:$0xff]
        %v466 = vld [vmem:[%s305 + $0x80] sm:$0xff]
        %v467 = vld [vmem:[%s305 + $0xc0] sm:$0xff]
        %v468 = vld [vmem:[%s305 + $0x100] sm:$0xff]
        %v469 = vld [vmem:[%s305 + $0x140] sm:$0xff]
        %v470 = vld [vmem:[%s305 + $0x180] sm:$0xff]
        %v471 = vld [vmem:[%s305 + $0x1c0] sm:$0xff]
        %v472 = vunpack.c.l.bf16 %v464
        %v473 = vunpack.c.h.bf16 %v464
        %v474 = vunpack.c.l.bf16 %v465
        %v475 = vunpack.c.h.bf16 %v465
        %v476 = vunpack.c.l.bf16 %v466
        %v477 = vunpack.c.h.bf16 %v466
        %v478 = vunpack.c.l.bf16 %v467
        %v479 = vunpack.c.h.bf16 %v467
        %v480 = vunpack.c.l.bf16 %v468
        %v481 = vunpack.c.h.bf16 %v468
        %v482 = vunpack.c.l.bf16 %v469
        %v483 = vunpack.c.h.bf16 %v469
        %v484 = vunpack.c.l.bf16 %v470
        %v485 = vunpack.c.h.bf16 %v470
        %v486 = vunpack.c.l.bf16 %v471
        %v487 = vunpack.c.h.bf16 %v471
        %v489 = vlaneseq
        %v490 = vshrl.u32 %v489, 7
        %v491 = vsub.s32 0, %v490
        %v492 = vrot.slane %v387, %v491
        %493 = vset.pattern.permute.xlu0 0
        %494 = vperm.xlu0 %493, %v492
        %v495 = vpop.permute.xlu0 %494
        %v497 = vmul.f32 %v495, %v472
        %v498 = vmul.f32 %v495, %v473
        %v499 = vmul.f32 %v495, %v474
        %v500 = vmul.f32 %v495, %v475
        %v501 = vmul.f32 %v495, %v476
        %v502 = vmul.f32 %v495, %v477
        %v503 = vmul.f32 %v495, %v478
        %v504 = vmul.f32 %v495, %v479
        %v505 = vmul.f32 %v495, %v480
        %v506 = vmul.f32 %v495, %v481
        %v507 = vmul.f32 %v495, %v482
        %v508 = vmul.f32 %v495, %v483
        %v509 = vmul.f32 %v495, %v484
        %v510 = vmul.f32 %v495, %v485
        %v511 = vmul.f32 %v495, %v486
        %v512 = vmul.f32 %v495, %v487
        %v513 = vadd.f32 %v448, %v497
        %v514 = vadd.f32 %v449, %v498
        %v515 = vadd.f32 %v450, %v499
        %v516 = vadd.f32 %v451, %v500
        %v517 = vadd.f32 %v452, %v501
        %v518 = vadd.f32 %v453, %v502
        %v519 = vadd.f32 %v454, %v503
        %v520 = vadd.f32 %v455, %v504
        %v521 = vadd.f32 %v456, %v505
        %v522 = vadd.f32 %v457, %v506
        %v523 = vadd.f32 %v458, %v507
        %v524 = vadd.f32 %v459, %v508
        %v525 = vadd.f32 %v460, %v509
        %v526 = vadd.f32 %v461, %v510
        %v527 = vadd.f32 %v462, %v511
        %v528 = vadd.f32 %v463, %v512
        %v529 = vld [vmem:[%s305 + $0x8] sm:$0xff]
        %v530 = vld [vmem:[%s305 + $0x48] sm:$0xff]
        %v531 = vld [vmem:[%s305 + $0x88] sm:$0xff]
        %v532 = vld [vmem:[%s305 + $0xc8] sm:$0xff]
        %v533 = vld [vmem:[%s305 + $0x108] sm:$0xff]
        %v534 = vld [vmem:[%s305 + $0x148] sm:$0xff]
        %v535 = vld [vmem:[%s305 + $0x188] sm:$0xff]
        %v536 = vld [vmem:[%s305 + $0x1c8] sm:$0xff]
        %v537 = vunpack.c.l.bf16 %v529
        %v538 = vunpack.c.h.bf16 %v529
        %v539 = vunpack.c.l.bf16 %v530
        %v540 = vunpack.c.h.bf16 %v530
        %v541 = vunpack.c.l.bf16 %v531
        %v542 = vunpack.c.h.bf16 %v531
        %v543 = vunpack.c.l.bf16 %v532
        %v544 = vunpack.c.h.bf16 %v532
        %v545 = vunpack.c.l.bf16 %v533
        %v546 = vunpack.c.h.bf16 %v533
        %v547 = vunpack.c.l.bf16 %v534
        %v548 = vunpack.c.h.bf16 %v534
        %v549 = vunpack.c.l.bf16 %v535
        %v550 = vunpack.c.h.bf16 %v535
        %v551 = vunpack.c.l.bf16 %v536
        %v552 = vunpack.c.h.bf16 %v536
        %553 = vset.pattern.permute.xlu0 1
        %554 = vperm.xlu0 %553, %v492
        %v555 = vpop.permute.xlu0 %554
        %v557 = vmul.f32 %v555, %v537
        %v558 = vmul.f32 %v555, %v538
        %v559 = vmul.f32 %v555, %v539
        %v560 = vmul.f32 %v555, %v540
        %v561 = vmul.f32 %v555, %v541
        %v562 = vmul.f32 %v555, %v542
        %v563 = vmul.f32 %v555, %v543
        %v564 = vmul.f32 %v555, %v544
        %v565 = vmul.f32 %v555, %v545
        %v566 = vmul.f32 %v555, %v546
        %v567 = vmul.f32 %v555, %v547
        %v568 = vmul.f32 %v555, %v548
        %v569 = vmul.f32 %v555, %v549
        %v570 = vmul.f32 %v555, %v550
        %v571 = vmul.f32 %v555, %v551
        %v572 = vmul.f32 %v555, %v552
        %v573 = vadd.f32 %v513, %v557
        %v574 = vadd.f32 %v514, %v558
        %v575 = vadd.f32 %v515, %v559
        %v576 = vadd.f32 %v516, %v560
        %v577 = vadd.f32 %v517, %v561
        %v578 = vadd.f32 %v518, %v562
        %v579 = vadd.f32 %v519, %v563
        %v580 = vadd.f32 %v520, %v564
        %v581 = vadd.f32 %v521, %v565
        %v582 = vadd.f32 %v522, %v566
        %v583 = vadd.f32 %v523, %v567
        %v584 = vadd.f32 %v524, %v568
        %v585 = vadd.f32 %v525, %v569
        %v586 = vadd.f32 %v526, %v570
        %v587 = vadd.f32 %v527, %v571
        %v588 = vadd.f32 %v528, %v572
        %v589 = vld [vmem:[%s305 + $0x10] sm:$0xff]
        %v590 = vld [vmem:[%s305 + $0x50] sm:$0xff]
        %v591 = vld [vmem:[%s305 + $0x90] sm:$0xff]
        %v592 = vld [vmem:[%s305 + $0xd0] sm:$0xff]
        %v593 = vld [vmem:[%s305 + $0x110] sm:$0xff]
        %v594 = vld [vmem:[%s305 + $0x150] sm:$0xff]
        %v595 = vld [vmem:[%s305 + $0x190] sm:$0xff]
        %v596 = vld [vmem:[%s305 + $0x1d0] sm:$0xff]
        %v597 = vunpack.c.l.bf16 %v589
        %v598 = vunpack.c.h.bf16 %v589
        %v599 = vunpack.c.l.bf16 %v590
        %v600 = vunpack.c.h.bf16 %v590
        %v601 = vunpack.c.l.bf16 %v591
        %v602 = vunpack.c.h.bf16 %v591
        %v603 = vunpack.c.l.bf16 %v592
        %v604 = vunpack.c.h.bf16 %v592
        %v605 = vunpack.c.l.bf16 %v593
        %v606 = vunpack.c.h.bf16 %v593
        %v607 = vunpack.c.l.bf16 %v594
        %v608 = vunpack.c.h.bf16 %v594
        %v609 = vunpack.c.l.bf16 %v595
        %v610 = vunpack.c.h.bf16 %v595
        %v611 = vunpack.c.l.bf16 %v596
        %v612 = vunpack.c.h.bf16 %v596
        %613 = vset.pattern.permute.xlu0 2
        %614 = vperm.xlu0 %613, %v492
        %v615 = vpop.permute.xlu0 %614
        %v617 = vmul.f32 %v615, %v597
        %v618 = vmul.f32 %v615, %v598
        %v619 = vmul.f32 %v615, %v599
        %v620 = vmul.f32 %v615, %v600
        %v621 = vmul.f32 %v615, %v601
        %v622 = vmul.f32 %v615, %v602
        %v623 = vmul.f32 %v615, %v603
        %v624 = vmul.f32 %v615, %v604
        %v625 = vmul.f32 %v615, %v605
        %v626 = vmul.f32 %v615, %v606
        %v627 = vmul.f32 %v615, %v607
        %v628 = vmul.f32 %v615, %v608
        %v629 = vmul.f32 %v615, %v609
        %v630 = vmul.f32 %v615, %v610
        %v631 = vmul.f32 %v615, %v611
        %v632 = vmul.f32 %v615, %v612
        %v633 = vadd.f32 %v573, %v617
        %v634 = vadd.f32 %v574, %v618
        %v635 = vadd.f32 %v575, %v619
        %v636 = vadd.f32 %v576, %v620
        %v637 = vadd.f32 %v577, %v621
        %v638 = vadd.f32 %v578, %v622
        %v639 = vadd.f32 %v579, %v623
        %v640 = vadd.f32 %v580, %v624
        %v641 = vadd.f32 %v581, %v625
        %v642 = vadd.f32 %v582, %v626
        %v643 = vadd.f32 %v583, %v627
        %v644 = vadd.f32 %v584, %v628
        %v645 = vadd.f32 %v585, %v629
        %v646 = vadd.f32 %v586, %v630
        %v647 = vadd.f32 %v587, %v631
        %v648 = vadd.f32 %v588, %v632
        %v649 = vld [vmem:[%s305 + $0x18] sm:$0xff]
        %v650 = vld [vmem:[%s305 + $0x58] sm:$0xff]
        %v651 = vld [vmem:[%s305 + $0x98] sm:$0xff]
        %v652 = vld [vmem:[%s305 + $0xd8] sm:$0xff]
        %v653 = vld [vmem:[%s305 + $0x118] sm:$0xff]
        %v654 = vld [vmem:[%s305 + $0x158] sm:$0xff]
        %v655 = vld [vmem:[%s305 + $0x198] sm:$0xff]
        %v656 = vld [vmem:[%s305 + $0x1d8] sm:$0xff]
        %v657 = vunpack.c.l.bf16 %v649
        %v658 = vunpack.c.h.bf16 %v649
        %v659 = vunpack.c.l.bf16 %v650
        %v660 = vunpack.c.h.bf16 %v650
        %v661 = vunpack.c.l.bf16 %v651
        %v662 = vunpack.c.h.bf16 %v651
        %v663 = vunpack.c.l.bf16 %v652
        %v664 = vunpack.c.h.bf16 %v652
        %v665 = vunpack.c.l.bf16 %v653
        %v666 = vunpack.c.h.bf16 %v653
        %v667 = vunpack.c.l.bf16 %v654
        %v668 = vunpack.c.h.bf16 %v654
        %v669 = vunpack.c.l.bf16 %v655
        %v670 = vunpack.c.h.bf16 %v655
        %v671 = vunpack.c.l.bf16 %v656
        %v672 = vunpack.c.h.bf16 %v656
        %673 = vset.pattern.permute.xlu0 3
        %674 = vperm.xlu0 %673, %v492
        %v675 = vpop.permute.xlu0 %674
        %v677 = vmul.f32 %v675, %v657
        %v678 = vmul.f32 %v675, %v658
        %v679 = vmul.f32 %v675, %v659
        %v680 = vmul.f32 %v675, %v660
        %v681 = vmul.f32 %v675, %v661
        %v682 = vmul.f32 %v675, %v662
        %v683 = vmul.f32 %v675, %v663
        %v684 = vmul.f32 %v675, %v664
        %v685 = vmul.f32 %v675, %v665
        %v686 = vmul.f32 %v675, %v666
        %v687 = vmul.f32 %v675, %v667
        %v688 = vmul.f32 %v675, %v668
        %v689 = vmul.f32 %v675, %v669
        %v690 = vmul.f32 %v675, %v670
        %v691 = vmul.f32 %v675, %v671
        %v692 = vmul.f32 %v675, %v672
        %v693 = vadd.f32 %v633, %v677
        %v694 = vadd.f32 %v634, %v678
        %v695 = vadd.f32 %v635, %v679
        %v696 = vadd.f32 %v636, %v680
        %v697 = vadd.f32 %v637, %v681
        %v698 = vadd.f32 %v638, %v682
        %v699 = vadd.f32 %v639, %v683
        %v700 = vadd.f32 %v640, %v684
        %v701 = vadd.f32 %v641, %v685
        %v702 = vadd.f32 %v642, %v686
        %v703 = vadd.f32 %v643, %v687
        %v704 = vadd.f32 %v644, %v688
        %v705 = vadd.f32 %v645, %v689
        %v706 = vadd.f32 %v646, %v690
        %v707 = vadd.f32 %v647, %v691
        %v708 = vadd.f32 %v648, %v692
        %v709 = vld [vmem:[%s305 + $0x20] sm:$0xff]
        %v710 = vld [vmem:[%s305 + $0x60] sm:$0xff]
        %v711 = vld [vmem:[%s305 + $0xa0] sm:$0xff]
        %v712 = vld [vmem:[%s305 + $0xe0] sm:$0xff]
        %v713 = vld [vmem:[%s305 + $0x120] sm:$0xff]
        %v714 = vld [vmem:[%s305 + $0x160] sm:$0xff]
        %v715 = vld [vmem:[%s305 + $0x1a0] sm:$0xff]
        %v716 = vld [vmem:[%s305 + $0x1e0] sm:$0xff]
        %v717 = vunpack.c.l.bf16 %v709
        %v718 = vunpack.c.h.bf16 %v709
        %v719 = vunpack.c.l.bf16 %v710
        %v720 = vunpack.c.h.bf16 %v710
        %v721 = vunpack.c.l.bf16 %v711
        %v722 = vunpack.c.h.bf16 %v711
        %v723 = vunpack.c.l.bf16 %v712
        %v724 = vunpack.c.h.bf16 %v712
        %v725 = vunpack.c.l.bf16 %v713
        %v726 = vunpack.c.h.bf16 %v713
        %v727 = vunpack.c.l.bf16 %v714
        %v728 = vunpack.c.h.bf16 %v714
        %v729 = vunpack.c.l.bf16 %v715
        %v730 = vunpack.c.h.bf16 %v715
        %v731 = vunpack.c.l.bf16 %v716
        %v732 = vunpack.c.h.bf16 %v716
        %733 = vset.pattern.permute.xlu0 4
        %734 = vperm.xlu0 %733, %v492
        %v735 = vpop.permute.xlu0 %734
        %v737 = vmul.f32 %v735, %v717
        %v738 = vmul.f32 %v735, %v718
        %v739 = vmul.f32 %v735, %v719
        %v740 = vmul.f32 %v735, %v720
        %v741 = vmul.f32 %v735, %v721
        %v742 = vmul.f32 %v735, %v722
        %v743 = vmul.f32 %v735, %v723
        %v744 = vmul.f32 %v735, %v724
        %v745 = vmul.f32 %v735, %v725
        %v746 = vmul.f32 %v735, %v726
        %v747 = vmul.f32 %v735, %v727
        %v748 = vmul.f32 %v735, %v728
        %v749 = vmul.f32 %v735, %v729
        %v750 = vmul.f32 %v735, %v730
        %v751 = vmul.f32 %v735, %v731
        %v752 = vmul.f32 %v735, %v732
        %v753 = vadd.f32 %v693, %v737
        %v754 = vadd.f32 %v694, %v738
        %v755 = vadd.f32 %v695, %v739
        %v756 = vadd.f32 %v696, %v740
        %v757 = vadd.f32 %v697, %v741
        %v758 = vadd.f32 %v698, %v742
        %v759 = vadd.f32 %v699, %v743
        %v760 = vadd.f32 %v700, %v744
        %v761 = vadd.f32 %v701, %v745
        %v762 = vadd.f32 %v702, %v746
        %v763 = vadd.f32 %v703, %v747
        %v764 = vadd.f32 %v704, %v748
        %v765 = vadd.f32 %v705, %v749
        %v766 = vadd.f32 %v706, %v750
        %v767 = vadd.f32 %v707, %v751
        %v768 = vadd.f32 %v708, %v752
        %v769 = vld [vmem:[%s305 + $0x28] sm:$0xff]
        %v770 = vld [vmem:[%s305 + $0x68] sm:$0xff]
        %v771 = vld [vmem:[%s305 + $0xa8] sm:$0xff]
        %v772 = vld [vmem:[%s305 + $0xe8] sm:$0xff]
        %v773 = vld [vmem:[%s305 + $0x128] sm:$0xff]
        %v774 = vld [vmem:[%s305 + $0x168] sm:$0xff]
        %v775 = vld [vmem:[%s305 + $0x1a8] sm:$0xff]
        %v776 = vld [vmem:[%s305 + $0x1e8] sm:$0xff]
        %v777 = vunpack.c.l.bf16 %v769
        %v778 = vunpack.c.h.bf16 %v769
        %v779 = vunpack.c.l.bf16 %v770
        %v780 = vunpack.c.h.bf16 %v770
        %v781 = vunpack.c.l.bf16 %v771
        %v782 = vunpack.c.h.bf16 %v771
        %v783 = vunpack.c.l.bf16 %v772
        %v784 = vunpack.c.h.bf16 %v772
        %v785 = vunpack.c.l.bf16 %v773
        %v786 = vunpack.c.h.bf16 %v773
        %v787 = vunpack.c.l.bf16 %v774
        %v788 = vunpack.c.h.bf16 %v774
        %v789 = vunpack.c.l.bf16 %v775
        %v790 = vunpack.c.h.bf16 %v775
        %v791 = vunpack.c.l.bf16 %v776
        %v792 = vunpack.c.h.bf16 %v776
        %793 = vset.pattern.permute.xlu0 5
        %794 = vperm.xlu0 %793, %v492
        %v795 = vpop.permute.xlu0 %794
        %v797 = vmul.f32 %v795, %v777
        %v798 = vmul.f32 %v795, %v778
        %v799 = vmul.f32 %v795, %v779
        %v800 = vmul.f32 %v795, %v780
        %v801 = vmul.f32 %v795, %v781
        %v802 = vmul.f32 %v795, %v782
        %v803 = vmul.f32 %v795, %v783
        %v804 = vmul.f32 %v795, %v784
        %v805 = vmul.f32 %v795, %v785
        %v806 = vmul.f32 %v795, %v786
        %v807 = vmul.f32 %v795, %v787
        %v808 = vmul.f32 %v795, %v788
        %v809 = vmul.f32 %v795, %v789
        %v810 = vmul.f32 %v795, %v790
        %v811 = vmul.f32 %v795, %v791
        %v812 = vmul.f32 %v795, %v792
        %v813 = vadd.f32 %v753, %v797
        %v814 = vadd.f32 %v754, %v798
        %v815 = vadd.f32 %v755, %v799
        %v816 = vadd.f32 %v756, %v800
        %v817 = vadd.f32 %v757, %v801
        %v818 = vadd.f32 %v758, %v802
        %v819 = vadd.f32 %v759, %v803
        %v820 = vadd.f32 %v760, %v804
        %v821 = vadd.f32 %v761, %v805
        %v822 = vadd.f32 %v762, %v806
        %v823 = vadd.f32 %v763, %v807
        %v824 = vadd.f32 %v764, %v808
        %v825 = vadd.f32 %v765, %v809
        %v826 = vadd.f32 %v766, %v810
        %v827 = vadd.f32 %v767, %v811
        %v828 = vadd.f32 %v768, %v812
        %v829 = vld [vmem:[%s305 + $0x30] sm:$0xff]
        %v830 = vld [vmem:[%s305 + $0x70] sm:$0xff]
        %v831 = vld [vmem:[%s305 + $0xb0] sm:$0xff]
        %v832 = vld [vmem:[%s305 + $0xf0] sm:$0xff]
        %v833 = vld [vmem:[%s305 + $0x130] sm:$0xff]
        %v834 = vld [vmem:[%s305 + $0x170] sm:$0xff]
        %v835 = vld [vmem:[%s305 + $0x1b0] sm:$0xff]
        %v836 = vld [vmem:[%s305 + $0x1f0] sm:$0xff]
        %v837 = vunpack.c.l.bf16 %v829
        %v838 = vunpack.c.h.bf16 %v829
        %v839 = vunpack.c.l.bf16 %v830
        %v840 = vunpack.c.h.bf16 %v830
        %v841 = vunpack.c.l.bf16 %v831
        %v842 = vunpack.c.h.bf16 %v831
        %v843 = vunpack.c.l.bf16 %v832
        %v844 = vunpack.c.h.bf16 %v832
        %v845 = vunpack.c.l.bf16 %v833
        %v846 = vunpack.c.h.bf16 %v833
        %v847 = vunpack.c.l.bf16 %v834
        %v848 = vunpack.c.h.bf16 %v834
        %v849 = vunpack.c.l.bf16 %v835
        %v850 = vunpack.c.h.bf16 %v835
        %v851 = vunpack.c.l.bf16 %v836
        %v852 = vunpack.c.h.bf16 %v836
        %853 = vset.pattern.permute.xlu0 6
        %854 = vperm.xlu0 %853, %v492
        %v855 = vpop.permute.xlu0 %854
        %v857 = vmul.f32 %v855, %v837
        %v858 = vmul.f32 %v855, %v838
        %v859 = vmul.f32 %v855, %v839
        %v860 = vmul.f32 %v855, %v840
        %v861 = vmul.f32 %v855, %v841
        %v862 = vmul.f32 %v855, %v842
        %v863 = vmul.f32 %v855, %v843
        %v864 = vmul.f32 %v855, %v844
        %v865 = vmul.f32 %v855, %v845
        %v866 = vmul.f32 %v855, %v846
        %v867 = vmul.f32 %v855, %v847
        %v868 = vmul.f32 %v855, %v848
        %v869 = vmul.f32 %v855, %v849
        %v870 = vmul.f32 %v855, %v850
        %v871 = vmul.f32 %v855, %v851
        %v872 = vmul.f32 %v855, %v852
        %v873 = vadd.f32 %v813, %v857
        %v874 = vadd.f32 %v814, %v858
        %v875 = vadd.f32 %v815, %v859
        %v876 = vadd.f32 %v816, %v860
        %v877 = vadd.f32 %v817, %v861
        %v878 = vadd.f32 %v818, %v862
        %v879 = vadd.f32 %v819, %v863
        %v880 = vadd.f32 %v820, %v864
        %v881 = vadd.f32 %v821, %v865
        %v882 = vadd.f32 %v822, %v866
        %v883 = vadd.f32 %v823, %v867
        %v884 = vadd.f32 %v824, %v868
        %v885 = vadd.f32 %v825, %v869
        %v886 = vadd.f32 %v826, %v870
        %v887 = vadd.f32 %v827, %v871
        %v888 = vadd.f32 %v828, %v872
        %v889 = vld [vmem:[%s305 + $0x38] sm:$0xff]
        %v890 = vld [vmem:[%s305 + $0x78] sm:$0xff]
        %v891 = vld [vmem:[%s305 + $0xb8] sm:$0xff]
        %v892 = vld [vmem:[%s305 + $0xf8] sm:$0xff]
        %v893 = vld [vmem:[%s305 + $0x138] sm:$0xff]
        %v894 = vld [vmem:[%s305 + $0x178] sm:$0xff]
        %v895 = vld [vmem:[%s305 + $0x1b8] sm:$0xff]
        %v896 = vld [vmem:[%s305 + $0x1f8] sm:$0xff]
        %v897 = vunpack.c.l.bf16 %v889
        %v898 = vunpack.c.h.bf16 %v889
        %v899 = vunpack.c.l.bf16 %v890
        %v900 = vunpack.c.h.bf16 %v890
        %v901 = vunpack.c.l.bf16 %v891
        %v902 = vunpack.c.h.bf16 %v891
        %v903 = vunpack.c.l.bf16 %v892
        %v904 = vunpack.c.h.bf16 %v892
        %v905 = vunpack.c.l.bf16 %v893
        %v906 = vunpack.c.h.bf16 %v893
        %v907 = vunpack.c.l.bf16 %v894
        %v908 = vunpack.c.h.bf16 %v894
        %v909 = vunpack.c.l.bf16 %v895
        %v910 = vunpack.c.h.bf16 %v895
        %v911 = vunpack.c.l.bf16 %v896
        %v912 = vunpack.c.h.bf16 %v896
        %913 = vset.pattern.permute.xlu0 7
        %914 = vperm.xlu0 %913, %v492
        %v915 = vpop.permute.xlu0 %914
        %v917 = vmul.f32 %v915, %v897
        %v918 = vmul.f32 %v915, %v898
        %v919 = vmul.f32 %v915, %v899
        %v920 = vmul.f32 %v915, %v900
        %v921 = vmul.f32 %v915, %v901
        %v922 = vmul.f32 %v915, %v902
        %v923 = vmul.f32 %v915, %v903
        %v924 = vmul.f32 %v915, %v904
        %v925 = vmul.f32 %v915, %v905
        %v926 = vmul.f32 %v915, %v906
        %v927 = vmul.f32 %v915, %v907
        %v928 = vmul.f32 %v915, %v908
        %v929 = vmul.f32 %v915, %v909
        %v930 = vmul.f32 %v915, %v910
        %v931 = vmul.f32 %v915, %v911
        %v932 = vmul.f32 %v915, %v912
        %v933 = vadd.f32 %v873, %v917
        %v934 = vadd.f32 %v874, %v918
        %v935 = vadd.f32 %v875, %v919
        %v936 = vadd.f32 %v876, %v920
        %v937 = vadd.f32 %v877, %v921
        %v938 = vadd.f32 %v878, %v922
        %v939 = vadd.f32 %v879, %v923
        %v940 = vadd.f32 %v880, %v924
        %v941 = vadd.f32 %v881, %v925
        %v942 = vadd.f32 %v882, %v926
        %v943 = vadd.f32 %v883, %v927
        %v944 = vadd.f32 %v884, %v928
        %v945 = vadd.f32 %v885, %v929
        %v946 = vadd.f32 %v886, %v930
        %v947 = vadd.f32 %v887, %v931
        %v948 = vadd.f32 %v888, %v932
        %vm949 = vcmp.ge.f32.partialorder %v933, 0.0
        %vm950 = vcmp.ge.f32.partialorder %v934, 0.0
        %vm951 = vcmp.ge.f32.partialorder %v935, 0.0
        %vm952 = vcmp.ge.f32.partialorder %v936, 0.0
        %vm953 = vcmp.ge.f32.partialorder %v937, 0.0
        %vm954 = vcmp.ge.f32.partialorder %v938, 0.0
        %vm955 = vcmp.ge.f32.partialorder %v939, 0.0
        %vm956 = vcmp.ge.f32.partialorder %v940, 0.0
        %vm957 = vcmp.ge.f32.partialorder %v941, 0.0
        %vm958 = vcmp.ge.f32.partialorder %v942, 0.0
        %vm959 = vcmp.ge.f32.partialorder %v943, 0.0
        %vm960 = vcmp.ge.f32.partialorder %v944, 0.0
        %vm961 = vcmp.ge.f32.partialorder %v945, 0.0
        %vm962 = vcmp.ge.f32.partialorder %v946, 0.0
        %vm963 = vcmp.ge.f32.partialorder %v947, 0.0
        %vm964 = vcmp.ge.f32.partialorder %v948, 0.0
        %v965 = vmul.f32 %v933, 0.01
        %v966 = vmul.f32 %v934, 0.01
        %v967 = vmul.f32 %v935, 0.01
        %v968 = vmul.f32 %v936, 0.01
        %v969 = vmul.f32 %v937, 0.01
        %v970 = vmul.f32 %v938, 0.01
        %v971 = vmul.f32 %v939, 0.01
        %v972 = vmul.f32 %v940, 0.01
        %v973 = vmul.f32 %v941, 0.01
        %v974 = vmul.f32 %v942, 0.01
        %v975 = vmul.f32 %v943, 0.01
        %v976 = vmul.f32 %v944, 0.01
        %v977 = vmul.f32 %v945, 0.01
        %v978 = vmul.f32 %v946, 0.01
        %v979 = vmul.f32 %v947, 0.01
        %v980 = vmul.f32 %v948, 0.01
        %v981 = vsel %vm949, %v933, %v965
        %v982 = vsel %vm950, %v934, %v966
        %v983 = vsel %vm951, %v935, %v967
        %v984 = vsel %vm952, %v936, %v968
        %v985 = vsel %vm953, %v937, %v969
        %v986 = vsel %vm954, %v938, %v970
        %v987 = vsel %vm955, %v939, %v971
        %v988 = vsel %vm956, %v940, %v972
        %v989 = vsel %vm957, %v941, %v973
        %v990 = vsel %vm958, %v942, %v974
        %v991 = vsel %vm959, %v943, %v975
        %v992 = vsel %vm960, %v944, %v976
        %v993 = vsel %vm961, %v945, %v977
        %v994 = vsel %vm962, %v946, %v978
        %v995 = vsel %vm963, %v947, %v979
        %v996 = vsel %vm964, %v948, %v980
        %vm997 = vcmp.gt.f32.partialorder %v371, 0.0
        %vm998 = vcmp.gt.f32.partialorder %v372, 0.0
        %vm999 = vcmp.gt.f32.partialorder %v373, 0.0
        %vm1000 = vcmp.gt.f32.partialorder %v374, 0.0
        %vm1001 = vcmp.gt.f32.partialorder %v375, 0.0
        %vm1002 = vcmp.gt.f32.partialorder %v376, 0.0
        %vm1003 = vcmp.gt.f32.partialorder %v377, 0.0
        %vm1004 = vcmp.gt.f32.partialorder %v378, 0.0
        %vm1005 = vcmp.gt.f32.partialorder %v379, 0.0
        %vm1006 = vcmp.gt.f32.partialorder %v380, 0.0
        %vm1007 = vcmp.gt.f32.partialorder %v381, 0.0
        %vm1008 = vcmp.gt.f32.partialorder %v382, 0.0
        %vm1009 = vcmp.gt.f32.partialorder %v383, 0.0
        %vm1010 = vcmp.gt.f32.partialorder %v384, 0.0
        %vm1011 = vcmp.gt.f32.partialorder %v385, 0.0
        %vm1012 = vcmp.gt.f32.partialorder %v386, 0.0
        %v1013 = vsel %vm997, %v981, -1e+30
        %v1014 = vsel %vm998, %v982, -1e+30
        %v1015 = vsel %vm999, %v983, -1e+30
        %v1016 = vsel %vm1000, %v984, -1e+30
        %v1017 = vsel %vm1001, %v985, -1e+30
        %v1018 = vsel %vm1002, %v986, -1e+30
        %v1019 = vsel %vm1003, %v987, -1e+30
        %v1020 = vsel %vm1004, %v988, -1e+30
        %v1021 = vsel %vm1005, %v989, -1e+30
        %v1022 = vsel %vm1006, %v990, -1e+30
        %v1023 = vsel %vm1007, %v991, -1e+30
        %v1024 = vsel %vm1008, %v992, -1e+30
        %v1025 = vsel %vm1009, %v993, -1e+30
        %v1026 = vsel %vm1010, %v994, -1e+30
        %v1027 = vsel %vm1011, %v995, -1e+30
        %v1028 = vsel %vm1012, %v996, -1e+30
        %v1029 = vmax.f32 %v1013, %v1014
        %1030 = vmax.xlane.f32.xlu0 %v1029
        %v1031 = vpop.xlane.xlu0 %1030
        %v1032 = vmax.f32 %v1015, %v1016
        %1033 = vmax.xlane.f32.xlu0 %v1032
        %v1034 = vpop.xlane.xlu0 %1033
        %v1035 = vmax.f32 %v1017, %v1018
        %1036 = vmax.xlane.f32.xlu0 %v1035
        %v1037 = vpop.xlane.xlu0 %1036
        %v1038 = vmax.f32 %v1019, %v1020
        %1039 = vmax.xlane.f32.xlu0 %v1038
        %v1040 = vpop.xlane.xlu0 %1039
        %v1041 = vmax.f32 %v1021, %v1022
        %1042 = vmax.xlane.f32.xlu0 %v1041
        %v1043 = vpop.xlane.xlu0 %1042
        %v1044 = vmax.f32 %v1023, %v1024
        %1045 = vmax.xlane.f32.xlu0 %v1044
        %v1046 = vpop.xlane.xlu0 %1045
        %v1047 = vmax.f32 %v1025, %v1026
        %1048 = vmax.xlane.f32.xlu0 %v1047
        %v1049 = vpop.xlane.xlu0 %1048
        %v1050 = vmax.f32 %v1027, %v1028
        %1051 = vmax.xlane.f32.xlu0 %v1050
        %v1052 = vpop.xlane.xlu0 %1051
        %v1053 = vsub.f32 %v1013, %v1031
        %v1054 = vsub.f32 %v1014, %v1031
        %v1055 = vsub.f32 %v1015, %v1034
        %v1056 = vsub.f32 %v1016, %v1034
        %v1057 = vsub.f32 %v1017, %v1037
        %v1058 = vsub.f32 %v1018, %v1037
        %v1059 = vsub.f32 %v1019, %v1040
        %v1060 = vsub.f32 %v1020, %v1040
        %v1061 = vsub.f32 %v1021, %v1043
        %v1062 = vsub.f32 %v1022, %v1043
        %v1063 = vsub.f32 %v1023, %v1046
        %v1064 = vsub.f32 %v1024, %v1046
        %v1065 = vsub.f32 %v1025, %v1049
        %v1066 = vsub.f32 %v1026, %v1049
        %v1067 = vsub.f32 %v1027, %v1052
        %v1068 = vsub.f32 %v1028, %v1052
        %v1069 = vmul.f32 %v1053, 1.442695
        %v1070 = vpow.pop %v1069
        %v1071 = vmul.f32 %v1054, 1.442695
        %v1072 = vpow.pop %v1071
        %v1073 = vmul.f32 %v1055, 1.442695
        %v1074 = vpow.pop %v1073
        %v1075 = vmul.f32 %v1056, 1.442695
        %v1076 = vpow.pop %v1075
        %v1077 = vmul.f32 %v1057, 1.442695
        %v1078 = vpow.pop %v1077
        %v1079 = vmul.f32 %v1058, 1.442695
        %v1080 = vpow.pop %v1079
        %v1081 = vmul.f32 %v1059, 1.442695
        %v1082 = vpow.pop %v1081
        %v1083 = vmul.f32 %v1060, 1.442695
        %v1084 = vpow.pop %v1083
        %v1085 = vmul.f32 %v1061, 1.442695
        %v1086 = vpow.pop %v1085
        %v1087 = vmul.f32 %v1062, 1.442695
        %v1088 = vpow.pop %v1087
        %v1089 = vmul.f32 %v1063, 1.442695
        %v1090 = vpow.pop %v1089
        %v1091 = vmul.f32 %v1064, 1.442695
        %v1092 = vpow.pop %v1091
        %v1093 = vmul.f32 %v1065, 1.442695
        %v1094 = vpow.pop %v1093
        %v1095 = vmul.f32 %v1066, 1.442695
        %v1096 = vpow.pop %v1095
        %v1097 = vmul.f32 %v1067, 1.442695
        %v1098 = vpow.pop %v1097
        %v1099 = vmul.f32 %v1068, 1.442695
        %v1100 = vpow.pop %v1099
        %v1101 = vmul.f32 %v1070, %v371
        %v1102 = vmul.f32 %v1072, %v372
        %v1103 = vmul.f32 %v1074, %v373
        %v1104 = vmul.f32 %v1076, %v374
        %v1105 = vmul.f32 %v1078, %v375
        %v1106 = vmul.f32 %v1080, %v376
        %v1107 = vmul.f32 %v1082, %v377
        %v1108 = vmul.f32 %v1084, %v378
        %v1109 = vmul.f32 %v1086, %v379
        %v1110 = vmul.f32 %v1088, %v380
        %v1111 = vmul.f32 %v1090, %v381
        %v1112 = vmul.f32 %v1092, %v382
        %v1113 = vmul.f32 %v1094, %v383
        %v1114 = vmul.f32 %v1096, %v384
        %v1115 = vmul.f32 %v1098, %v385
        %v1116 = vmul.f32 %v1100, %v386
        %v1117 = vadd.f32 %v1101, %v1102
        %1118 = vadd.xlane.f32.xlu0 %v1117
        %v1119 = vpop.xlane.xlu0 %1118
        %v1120 = vadd.f32 %v1103, %v1104
        %1121 = vadd.xlane.f32.xlu0 %v1120
        %v1122 = vpop.xlane.xlu0 %1121
        %v1123 = vadd.f32 %v1105, %v1106
        %1124 = vadd.xlane.f32.xlu0 %v1123
        %v1125 = vpop.xlane.xlu0 %1124
        %v1126 = vadd.f32 %v1107, %v1108
        %1127 = vadd.xlane.f32.xlu0 %v1126
        %v1128 = vpop.xlane.xlu0 %1127
        %v1129 = vadd.f32 %v1109, %v1110
        %1130 = vadd.xlane.f32.xlu0 %v1129
        %v1131 = vpop.xlane.xlu0 %1130
        %v1132 = vadd.f32 %v1111, %v1112
        %1133 = vadd.xlane.f32.xlu0 %v1132
        %v1134 = vpop.xlane.xlu0 %1133
        %v1135 = vadd.f32 %v1113, %v1114
        %1136 = vadd.xlane.f32.xlu0 %v1135
        %v1137 = vpop.xlane.xlu0 %1136
        %v1138 = vadd.f32 %v1115, %v1116
        %1139 = vadd.xlane.f32.xlu0 %v1138
        %v1140 = vpop.xlane.xlu0 %1139
        %v1141 = vrcp.pop %v1119
        %v1142 = vrcp.pop %v1122
        %v1143 = vrcp.pop %v1125
        %v1144 = vrcp.pop %v1128
        %v1145 = vrcp.pop %v1131
        %v1146 = vrcp.pop %v1134
        %v1147 = vrcp.pop %v1137
        %v1148 = vrcp.pop %v1140
        %v1149 = vmul.f32 %v1101, %v1141
        %v1150 = vmul.f32 %v1102, %v1141
        %v1151 = vmul.f32 %v1103, %v1142
        %v1152 = vmul.f32 %v1104, %v1142
        %v1153 = vmul.f32 %v1105, %v1143
        %v1154 = vmul.f32 %v1106, %v1143
        %v1155 = vmul.f32 %v1107, %v1144
        %v1156 = vmul.f32 %v1108, %v1144
        %v1157 = vmul.f32 %v1109, %v1145
        %v1158 = vmul.f32 %v1110, %v1145
        %v1159 = vmul.f32 %v1111, %v1146
        %v1160 = vmul.f32 %v1112, %v1146
        %v1161 = vmul.f32 %v1113, %v1147
        %v1162 = vmul.f32 %v1114, %v1147
        %v1163 = vmul.f32 %v1115, %v1148
        %v1164 = vmul.f32 %v1116, %v1148
        %v1165 = vpack.c.bf16 %v1151, %v1149
        %v1166 = vpack.c.bf16 %v1152, %v1150
        %v1167 = vpack.c.bf16 %v1155, %v1153
        %v1168 = vpack.c.bf16 %v1156, %v1154
        %v1169 = vpack.c.bf16 %v1159, %v1157
        %v1170 = vpack.c.bf16 %v1160, %v1158
        %v1171 = vpack.c.bf16 %v1163, %v1161
        %v1172 = vpack.c.bf16 %v1164, %v1162
        %v1173 = vld [vmem:[#allocation2] sm:$0xf]
        %v1174 = vld [vmem:[#allocation2 + $0x4] sm:$0xf]
        %v1175 = vld [vmem:[#allocation2 + $0x8] sm:$0xf]
        %v1176 = vld [vmem:[#allocation2 + $0xc] sm:$0xf]
        %v1177 = vld [vmem:[#allocation2 + $0x10] sm:$0xf]
        %v1178 = vld [vmem:[#allocation2 + $0x14] sm:$0xf]
        %v1179 = vld [vmem:[#allocation2 + $0x18] sm:$0xf]
        %v1180 = vld [vmem:[#allocation2 + $0x1c] sm:$0xf]
        %v1181 = vld [vmem:[#allocation2 + $0x20] sm:$0xf]
        %v1182 = vld [vmem:[#allocation2 + $0x24] sm:$0xf]
        %v1183 = vld [vmem:[#allocation2 + $0x28] sm:$0xf]
        %v1184 = vld [vmem:[#allocation2 + $0x2c] sm:$0xf]
        %v1185 = vld [vmem:[#allocation2 + $0x30] sm:$0xf]
        %v1186 = vld [vmem:[#allocation2 + $0x34] sm:$0xf]
        %v1187 = vld [vmem:[#allocation2 + $0x38] sm:$0xf]
        %v1188 = vld [vmem:[#allocation2 + $0x3c] sm:$0xf]
        %v1189 = vld [vmem:[#allocation2 + $0x40] sm:$0xf]
        %v1190 = vld [vmem:[#allocation2 + $0x44] sm:$0xf]
        %v1191 = vld [vmem:[#allocation2 + $0x48] sm:$0xf]
        %v1192 = vld [vmem:[#allocation2 + $0x4c] sm:$0xf]
        %v1193 = vld [vmem:[#allocation2 + $0x50] sm:$0xf]
        %v1194 = vld [vmem:[#allocation2 + $0x54] sm:$0xf]
        %v1195 = vld [vmem:[#allocation2 + $0x58] sm:$0xf]
        %v1196 = vld [vmem:[#allocation2 + $0x5c] sm:$0xf]
        %v1197 = vld [vmem:[#allocation2 + $0x60] sm:$0xf]
        %v1198 = vld [vmem:[#allocation2 + $0x64] sm:$0xf]
        %v1199 = vld [vmem:[#allocation2 + $0x68] sm:$0xf]
        %v1200 = vld [vmem:[#allocation2 + $0x6c] sm:$0xf]
        %v1201 = vld [vmem:[#allocation2 + $0x70] sm:$0xf]
        %v1202 = vld [vmem:[#allocation2 + $0x74] sm:$0xf]
        %v1203 = vld [vmem:[#allocation2 + $0x78] sm:$0xf]
        %v1204 = vld [vmem:[#allocation2 + $0x7c] sm:$0xf]
        %v1205 = vld [vmem:[%s6] sm:$0xff]
        %v1206 = vmul.f32 %v1149, %v472
        %v1207 = vmul.f32 %v1150, %v473
        %v1208 = vmul.f32 %v1151, %v474
        %v1209 = vmul.f32 %v1152, %v475
        %v1210 = vmul.f32 %v1153, %v476
        %v1211 = vmul.f32 %v1154, %v477
        %v1212 = vmul.f32 %v1155, %v478
        %v1213 = vmul.f32 %v1156, %v479
        %v1214 = vmul.f32 %v1157, %v480
        %v1215 = vmul.f32 %v1158, %v481
        %v1216 = vmul.f32 %v1159, %v482
        %v1217 = vmul.f32 %v1160, %v483
        %v1218 = vmul.f32 %v1161, %v484
        %v1219 = vmul.f32 %v1162, %v485
        %v1220 = vmul.f32 %v1163, %v486
        %v1221 = vmul.f32 %v1164, %v487
        %v1222 = vadd.f32 %v1206, %v1207
        %1223 = vadd.xlane.f32.xlu0 %v1222
        %v1224 = vpop.xlane.xlu0 %1223
        %v1225 = vadd.f32 %v1208, %v1209
        %1226 = vadd.xlane.f32.xlu0 %v1225
        %v1227 = vpop.xlane.xlu0 %1226
        %v1228 = vadd.f32 %v1210, %v1211
        %1229 = vadd.xlane.f32.xlu0 %v1228
        %v1230 = vpop.xlane.xlu0 %1229
        %v1231 = vadd.f32 %v1212, %v1213
        %1232 = vadd.xlane.f32.xlu0 %v1231
        %v1233 = vpop.xlane.xlu0 %1232
        %v1234 = vadd.f32 %v1214, %v1215
        %1235 = vadd.xlane.f32.xlu0 %v1234
        %v1236 = vpop.xlane.xlu0 %1235
        %v1237 = vadd.f32 %v1216, %v1217
        %1238 = vadd.xlane.f32.xlu0 %v1237
        %v1239 = vpop.xlane.xlu0 %1238
        %v1240 = vadd.f32 %v1218, %v1219
        %1241 = vadd.xlane.f32.xlu0 %v1240
        %v1242 = vpop.xlane.xlu0 %1241
        %v1243 = vadd.f32 %v1220, %v1221
        %1244 = vadd.xlane.f32.xlu0 %v1243
        %v1245 = vpop.xlane.xlu0 %1244
        %v1246 = vlaneseq
        %v1247 = vshrl.u32 %v1246, 7
        %v1248 = vsub.s32 0, %v1247
        %v1249 = vrot.slane %v1205, %v1248
        %v1250 = vmul.f32 %v1224, %v1249
        %v1251 = vmul.f32 %v1227, %v1249
        %v1252 = vmul.f32 %v1230, %v1249
        %v1253 = vmul.f32 %v1233, %v1249
        %v1254 = vmul.f32 %v1236, %v1249
        %v1255 = vmul.f32 %v1239, %v1249
        %v1256 = vmul.f32 %v1242, %v1249
        %v1257 = vmul.f32 %v1245, %v1249
        %v1290 = vunpack.c.l.b16 %v1173
        %v1291 = vunpack.c.l.b16 %v1174
        %v1292 = vunpack.c.l.b16 %v1175
        %v1293 = vunpack.c.l.b16 %v1176
        %v1294 = vunpack.c.l.b16 %v1177
        %v1295 = vunpack.c.l.b16 %v1178
        %v1296 = vunpack.c.l.b16 %v1179
        %v1297 = vunpack.c.l.b16 %v1180
        %v1298 = vunpack.c.l.b16 %v1181
        %v1299 = vunpack.c.l.b16 %v1182
        %v1300 = vunpack.c.l.b16 %v1183
        %v1301 = vunpack.c.l.b16 %v1184
        %v1302 = vunpack.c.l.b16 %v1185
        %v1303 = vunpack.c.l.b16 %v1186
        %v1304 = vunpack.c.l.b16 %v1187
        %v1305 = vunpack.c.l.b16 %v1188
        %v1306 = vunpack.c.l.b16 %v1189
        %v1307 = vunpack.c.l.b16 %v1190
        %v1308 = vunpack.c.l.b16 %v1191
        %v1309 = vunpack.c.l.b16 %v1192
        %v1310 = vunpack.c.l.b16 %v1193
        %v1311 = vunpack.c.l.b16 %v1194
        %v1312 = vunpack.c.l.b16 %v1195
        %v1313 = vunpack.c.l.b16 %v1196
        %v1314 = vunpack.c.l.b16 %v1197
        %v1315 = vunpack.c.l.b16 %v1198
        %v1316 = vunpack.c.l.b16 %v1199
        %v1317 = vunpack.c.l.b16 %v1200
        %v1318 = vunpack.c.l.b16 %v1201
        %v1319 = vunpack.c.l.b16 %v1202
        %v1320 = vunpack.c.l.b16 %v1203
        %v1321 = vunpack.c.l.b16 %v1204
        %v1322 = vpack.c.b16 %v1291, %v1290
        %v1323 = vpack.c.b16 %v1293, %v1292
        %v1324 = vpack.c.b16 %v1295, %v1294
        %v1325 = vpack.c.b16 %v1297, %v1296
        %v1326 = vpack.c.b16 %v1299, %v1298
        %v1327 = vpack.c.b16 %v1301, %v1300
        %v1328 = vpack.c.b16 %v1303, %v1302
        %v1329 = vpack.c.b16 %v1305, %v1304
        %v1330 = vpack.c.b16 %v1307, %v1306
        %v1331 = vpack.c.b16 %v1309, %v1308
        %v1332 = vpack.c.b16 %v1311, %v1310
        %v1333 = vpack.c.b16 %v1313, %v1312
        %v1334 = vpack.c.b16 %v1315, %v1314
        %v1335 = vpack.c.b16 %v1317, %v1316
        %v1336 = vpack.c.b16 %v1319, %v1318
        %v1337 = vpack.c.b16 %v1321, %v1320
        %1354 = vmatprep.subr.bf16.mxu0 0
        %1355 = vmatpush1.bf16.msra.mxu0 %v1322
        %1356 = vmatprep.subr.bf16.mxu0 0
        %1357 = vmatpush1.bf16.msra.mxu0 %v1323
        %1358 = vmatprep.subr.bf16.mxu0 0
        %1359 = vmatpush1.bf16.msra.mxu0 %v1324
        %1360 = vmatprep.subr.bf16.mxu0 0
        %1361 = vmatpush1.bf16.msra.mxu0 %v1325
        %1362 = vmatprep.subr.bf16.mxu0 0
        %1363 = vmatpush1.bf16.msra.mxu0 %v1326
        %1364 = vmatprep.subr.bf16.mxu0 0
        %1365 = vmatpush1.bf16.msra.mxu0 %v1327
        %1366 = vmatprep.subr.bf16.mxu0 0
        %1367 = vmatpush1.bf16.msra.mxu0 %v1328
        %1368 = vmatprep.subr.bf16.mxu0 0
        %1369 = vmatpush1.bf16.msra.mxu0 %v1329
        %1370 = vmatprep.subr.bf16.mxu0 0
        %1371 = vmatpush1.bf16.msra.mxu0 %v1330
        %1372 = vmatprep.subr.bf16.mxu0 0
        %1373 = vmatpush1.bf16.msra.mxu0 %v1331
        %1374 = vmatprep.subr.bf16.mxu0 0
        %1375 = vmatpush1.bf16.msra.mxu0 %v1332
        %1376 = vmatprep.subr.bf16.mxu0 0
        %1377 = vmatpush1.bf16.msra.mxu0 %v1333
        %1378 = vmatprep.subr.bf16.mxu0 0
        %1379 = vmatpush1.bf16.msra.mxu0 %v1334
        %1380 = vmatprep.subr.bf16.mxu0 0
        %1381 = vmatpush1.bf16.msra.mxu0 %v1335
        %1382 = vmatprep.subr.bf16.mxu0 0
        %1383 = vmatpush1.bf16.msra.mxu0 %v1336
        %1384 = vmatprep.subr.bf16.mxu0 0
        %1385 = vmatpush1.bf16.msra.mxu0 %v1337
        %1386 = vmatprep.mubr.bf16.mxu0 %v1166
        %1387 = vmatmul.mubr.bf16.gmra.mrb[0].mxu0 %v1165
        %v1388 = vpop.f32.mrb[0].mxu0
        %v1389 = vadd.f32 %v1250, %v1388
        %v1390 = vpop.f32.mrb[0].mxu0
        %v1391 = vpop.f32.mrb[0].mxu0
        %v1392 = vadd.f32 %v1251, %v1391
        %v1393 = vpop.f32.mrb[0].mxu0
        %1394 = vmatprep.mubr.bf16.mxu0 %v1168
        %1395 = vmatmul.mubr.bf16.gmra.mrb[0].mxu0 %v1167
        %v1396 = vpop.f32.mrb[0].mxu0
        %v1397 = vadd.f32 %v1252, %v1396
        %v1398 = vpop.f32.mrb[0].mxu0
        %v1399 = vpop.f32.mrb[0].mxu0
        %v1400 = vadd.f32 %v1253, %v1399
        %v1401 = vpop.f32.mrb[0].mxu0
        %1402 = vmatprep.mubr.bf16.mxu0 %v1170
        %1403 = vmatmul.mubr.bf16.gmra.mrb[0].mxu0 %v1169
        %v1404 = vpop.f32.mrb[0].mxu0
        %v1405 = vadd.f32 %v1254, %v1404
        %v1406 = vpop.f32.mrb[0].mxu0
        %v1407 = vpop.f32.mrb[0].mxu0
        %v1408 = vadd.f32 %v1255, %v1407
        %v1409 = vpop.f32.mrb[0].mxu0
        %1410 = vmatprep.mubr.bf16.mxu0 %v1172
        %1411 = vmatmul.mubr.bf16.gmra.mrb[0].mxu0 %v1171
        %v1412 = vpop.f32.mrb[0].mxu0
        %v1413 = vadd.f32 %v1256, %v1412
        %v1414 = vpop.f32.mrb[0].mxu0
        %v1415 = vpop.f32.mrb[0].mxu0
        %v1416 = vadd.f32 %v1257, %v1415
        %v1417 = vpop.f32.mrb[0].mxu0
        %1418 = vdwg.mxu0
        %v1419 = vmul.f32 %v1149, %v537
        %v1420 = vmul.f32 %v1150, %v538
        %v1421 = vmul.f32 %v1151, %v539
        %v1422 = vmul.f32 %v1152, %v540
        %v1423 = vmul.f32 %v1153, %v541
        %v1424 = vmul.f32 %v1154, %v542
        %v1425 = vmul.f32 %v1155, %v543
        %v1426 = vmul.f32 %v1156, %v544
        %v1427 = vmul.f32 %v1157, %v545
        %v1428 = vmul.f32 %v1158, %v546
        %v1429 = vmul.f32 %v1159, %v547
        %v1430 = vmul.f32 %v1160, %v548
        %v1431 = vmul.f32 %v1161, %v549
        %v1432 = vmul.f32 %v1162, %v550
        %v1433 = vmul.f32 %v1163, %v551
        %v1434 = vmul.f32 %v1164, %v552
        %v1435 = vadd.f32 %v1419, %v1420
        %1436 = vadd.xlane.f32.xlu0 %v1435
        %v1437 = vpop.xlane.xlu0 %1436
        %v1438 = vadd.f32 %v1421, %v1422
        %1439 = vadd.xlane.f32.xlu0 %v1438
        %v1440 = vpop.xlane.xlu0 %1439
        %v1441 = vadd.f32 %v1423, %v1424
        %1442 = vadd.xlane.f32.xlu0 %v1441
        %v1443 = vpop.xlane.xlu0 %1442
        %v1444 = vadd.f32 %v1425, %v1426
        %1445 = vadd.xlane.f32.xlu0 %v1444
        %v1446 = vpop.xlane.xlu0 %1445
        %v1447 = vadd.f32 %v1427, %v1428
        %1448 = vadd.xlane.f32.xlu0 %v1447
        %v1449 = vpop.xlane.xlu0 %1448
        %v1450 = vadd.f32 %v1429, %v1430
        %1451 = vadd.xlane.f32.xlu0 %v1450
        %v1452 = vpop.xlane.xlu0 %1451
        %v1453 = vadd.f32 %v1431, %v1432
        %1454 = vadd.xlane.f32.xlu0 %v1453
        %v1455 = vpop.xlane.xlu0 %1454
        %v1456 = vadd.f32 %v1433, %v1434
        %1457 = vadd.xlane.f32.xlu0 %v1456
        %v1458 = vpop.xlane.xlu0 %1457
        %v1459 = vlaneseq
        %v1460 = vshrl.u32 %v1459, 7
        %v1461 = vsub.s32 1, %v1460
        %v1462 = vrot.slane %v1205, %v1461
        %v1463 = vmul.f32 %v1437, %v1462
        %v1464 = vmul.f32 %v1440, %v1462
        %v1465 = vmul.f32 %v1443, %v1462
        %v1466 = vmul.f32 %v1446, %v1462
        %v1467 = vmul.f32 %v1449, %v1462
        %v1468 = vmul.f32 %v1452, %v1462
        %v1469 = vmul.f32 %v1455, %v1462
        %v1470 = vmul.f32 %v1458, %v1462
        %v1471 = vadd.f32 %v1389, %v1463
        %v1472 = vadd.f32 %v1392, %v1464
        %v1473 = vadd.f32 %v1397, %v1465
        %v1474 = vadd.f32 %v1400, %v1466
        %v1475 = vadd.f32 %v1405, %v1467
        %v1476 = vadd.f32 %v1408, %v1468
        %v1477 = vadd.f32 %v1413, %v1469
        %v1478 = vadd.f32 %v1416, %v1470
        %v1479 = vmul.f32 %v1149, %v597
        %v1480 = vmul.f32 %v1150, %v598
        %v1481 = vmul.f32 %v1151, %v599
        %v1482 = vmul.f32 %v1152, %v600
        %v1483 = vmul.f32 %v1153, %v601
        %v1484 = vmul.f32 %v1154, %v602
        %v1485 = vmul.f32 %v1155, %v603
        %v1486 = vmul.f32 %v1156, %v604
        %v1487 = vmul.f32 %v1157, %v605
        %v1488 = vmul.f32 %v1158, %v606
        %v1489 = vmul.f32 %v1159, %v607
        %v1490 = vmul.f32 %v1160, %v608
        %v1491 = vmul.f32 %v1161, %v609
        %v1492 = vmul.f32 %v1162, %v610
        %v1493 = vmul.f32 %v1163, %v611
        %v1494 = vmul.f32 %v1164, %v612
        %v1495 = vadd.f32 %v1479, %v1480
        %1496 = vadd.xlane.f32.xlu0 %v1495
        %v1497 = vpop.xlane.xlu0 %1496
        %v1498 = vadd.f32 %v1481, %v1482
        %1499 = vadd.xlane.f32.xlu0 %v1498
        %v1500 = vpop.xlane.xlu0 %1499
        %v1501 = vadd.f32 %v1483, %v1484
        %1502 = vadd.xlane.f32.xlu0 %v1501
        %v1503 = vpop.xlane.xlu0 %1502
        %v1504 = vadd.f32 %v1485, %v1486
        %1505 = vadd.xlane.f32.xlu0 %v1504
        %v1506 = vpop.xlane.xlu0 %1505
        %v1507 = vadd.f32 %v1487, %v1488
        %1508 = vadd.xlane.f32.xlu0 %v1507
        %v1509 = vpop.xlane.xlu0 %1508
        %v1510 = vadd.f32 %v1489, %v1490
        %1511 = vadd.xlane.f32.xlu0 %v1510
        %v1512 = vpop.xlane.xlu0 %1511
        %v1513 = vadd.f32 %v1491, %v1492
        %1514 = vadd.xlane.f32.xlu0 %v1513
        %v1515 = vpop.xlane.xlu0 %1514
        %v1516 = vadd.f32 %v1493, %v1494
        %1517 = vadd.xlane.f32.xlu0 %v1516
        %v1518 = vpop.xlane.xlu0 %1517
        %v1519 = vlaneseq
        %v1520 = vshrl.u32 %v1519, 7
        %v1521 = vsub.s32 2, %v1520
        %v1522 = vrot.slane %v1205, %v1521
        %v1523 = vmul.f32 %v1497, %v1522
        %v1524 = vmul.f32 %v1500, %v1522
        %v1525 = vmul.f32 %v1503, %v1522
        %v1526 = vmul.f32 %v1506, %v1522
        %v1527 = vmul.f32 %v1509, %v1522
        %v1528 = vmul.f32 %v1512, %v1522
        %v1529 = vmul.f32 %v1515, %v1522
        %v1530 = vmul.f32 %v1518, %v1522
        %v1531 = vadd.f32 %v1471, %v1523
        %v1532 = vadd.f32 %v1472, %v1524
        %v1533 = vadd.f32 %v1473, %v1525
        %v1534 = vadd.f32 %v1474, %v1526
        %v1535 = vadd.f32 %v1475, %v1527
        %v1536 = vadd.f32 %v1476, %v1528
        %v1537 = vadd.f32 %v1477, %v1529
        %v1538 = vadd.f32 %v1478, %v1530
        %v1539 = vmul.f32 %v1149, %v657
        %v1540 = vmul.f32 %v1150, %v658
        %v1541 = vmul.f32 %v1151, %v659
        %v1542 = vmul.f32 %v1152, %v660
        %v1543 = vmul.f32 %v1153, %v661
        %v1544 = vmul.f32 %v1154, %v662
        %v1545 = vmul.f32 %v1155, %v663
        %v1546 = vmul.f32 %v1156, %v664
        %v1547 = vmul.f32 %v1157, %v665
        %v1548 = vmul.f32 %v1158, %v666
        %v1549 = vmul.f32 %v1159, %v667
        %v1550 = vmul.f32 %v1160, %v668
        %v1551 = vmul.f32 %v1161, %v669
        %v1552 = vmul.f32 %v1162, %v670
        %v1553 = vmul.f32 %v1163, %v671
        %v1554 = vmul.f32 %v1164, %v672
        %v1555 = vadd.f32 %v1539, %v1540
        %1556 = vadd.xlane.f32.xlu0 %v1555
        %v1557 = vpop.xlane.xlu0 %1556
        %v1558 = vadd.f32 %v1541, %v1542
        %1559 = vadd.xlane.f32.xlu0 %v1558
        %v1560 = vpop.xlane.xlu0 %1559
        %v1561 = vadd.f32 %v1543, %v1544
        %1562 = vadd.xlane.f32.xlu0 %v1561
        %v1563 = vpop.xlane.xlu0 %1562
        %v1564 = vadd.f32 %v1545, %v1546
        %1565 = vadd.xlane.f32.xlu0 %v1564
        %v1566 = vpop.xlane.xlu0 %1565
        %v1567 = vadd.f32 %v1547, %v1548
        %1568 = vadd.xlane.f32.xlu0 %v1567
        %v1569 = vpop.xlane.xlu0 %1568
        %v1570 = vadd.f32 %v1549, %v1550
        %1571 = vadd.xlane.f32.xlu0 %v1570
        %v1572 = vpop.xlane.xlu0 %1571
        %v1573 = vadd.f32 %v1551, %v1552
        %1574 = vadd.xlane.f32.xlu0 %v1573
        %v1575 = vpop.xlane.xlu0 %1574
        %v1576 = vadd.f32 %v1553, %v1554
        %1577 = vadd.xlane.f32.xlu0 %v1576
        %v1578 = vpop.xlane.xlu0 %1577
        %v1579 = vlaneseq
        %v1580 = vshrl.u32 %v1579, 7
        %v1581 = vsub.s32 3, %v1580
        %v1582 = vrot.slane %v1205, %v1581
        %v1583 = vmul.f32 %v1557, %v1582
        %v1584 = vmul.f32 %v1560, %v1582
        %v1585 = vmul.f32 %v1563, %v1582
        %v1586 = vmul.f32 %v1566, %v1582
        %v1587 = vmul.f32 %v1569, %v1582
        %v1588 = vmul.f32 %v1572, %v1582
        %v1589 = vmul.f32 %v1575, %v1582
        %v1590 = vmul.f32 %v1578, %v1582
        %v1591 = vadd.f32 %v1531, %v1583
        %v1592 = vadd.f32 %v1532, %v1584
        %v1593 = vadd.f32 %v1533, %v1585
        %v1594 = vadd.f32 %v1534, %v1586
        %v1595 = vadd.f32 %v1535, %v1587
        %v1596 = vadd.f32 %v1536, %v1588
        %v1597 = vadd.f32 %v1537, %v1589
        %v1598 = vadd.f32 %v1538, %v1590
        %v1599 = vmul.f32 %v1149, %v717
        %v1600 = vmul.f32 %v1150, %v718
        %v1601 = vmul.f32 %v1151, %v719
        %v1602 = vmul.f32 %v1152, %v720
        %v1603 = vmul.f32 %v1153, %v721
        %v1604 = vmul.f32 %v1154, %v722
        %v1605 = vmul.f32 %v1155, %v723
        %v1606 = vmul.f32 %v1156, %v724
        %v1607 = vmul.f32 %v1157, %v725
        %v1608 = vmul.f32 %v1158, %v726
        %v1609 = vmul.f32 %v1159, %v727
        %v1610 = vmul.f32 %v1160, %v728
        %v1611 = vmul.f32 %v1161, %v729
        %v1612 = vmul.f32 %v1162, %v730
        %v1613 = vmul.f32 %v1163, %v731
        %v1614 = vmul.f32 %v1164, %v732
        %v1615 = vadd.f32 %v1599, %v1600
        %1616 = vadd.xlane.f32.xlu0 %v1615
        %v1617 = vpop.xlane.xlu0 %1616
        %v1618 = vadd.f32 %v1601, %v1602
        %1619 = vadd.xlane.f32.xlu0 %v1618
        %v1620 = vpop.xlane.xlu0 %1619
        %v1621 = vadd.f32 %v1603, %v1604
        %1622 = vadd.xlane.f32.xlu0 %v1621
        %v1623 = vpop.xlane.xlu0 %1622
        %v1624 = vadd.f32 %v1605, %v1606
        %1625 = vadd.xlane.f32.xlu0 %v1624
        %v1626 = vpop.xlane.xlu0 %1625
        %v1627 = vadd.f32 %v1607, %v1608
        %1628 = vadd.xlane.f32.xlu0 %v1627
        %v1629 = vpop.xlane.xlu0 %1628
        %v1630 = vadd.f32 %v1609, %v1610
        %1631 = vadd.xlane.f32.xlu0 %v1630
        %v1632 = vpop.xlane.xlu0 %1631
        %v1633 = vadd.f32 %v1611, %v1612
        %1634 = vadd.xlane.f32.xlu0 %v1633
        %v1635 = vpop.xlane.xlu0 %1634
        %v1636 = vadd.f32 %v1613, %v1614
        %1637 = vadd.xlane.f32.xlu0 %v1636
        %v1638 = vpop.xlane.xlu0 %1637
        %v1639 = vlaneseq
        %v1640 = vshrl.u32 %v1639, 7
        %v1641 = vsub.s32 4, %v1640
        %v1642 = vrot.slane %v1205, %v1641
        %v1643 = vmul.f32 %v1617, %v1642
        %v1644 = vmul.f32 %v1620, %v1642
        %v1645 = vmul.f32 %v1623, %v1642
        %v1646 = vmul.f32 %v1626, %v1642
        %v1647 = vmul.f32 %v1629, %v1642
        %v1648 = vmul.f32 %v1632, %v1642
        %v1649 = vmul.f32 %v1635, %v1642
        %v1650 = vmul.f32 %v1638, %v1642
        %v1651 = vadd.f32 %v1591, %v1643
        %v1652 = vadd.f32 %v1592, %v1644
        %v1653 = vadd.f32 %v1593, %v1645
        %v1654 = vadd.f32 %v1594, %v1646
        %v1655 = vadd.f32 %v1595, %v1647
        %v1656 = vadd.f32 %v1596, %v1648
        %v1657 = vadd.f32 %v1597, %v1649
        %v1658 = vadd.f32 %v1598, %v1650
        %v1659 = vmul.f32 %v1149, %v777
        %v1660 = vmul.f32 %v1150, %v778
        %v1661 = vmul.f32 %v1151, %v779
        %v1662 = vmul.f32 %v1152, %v780
        %v1663 = vmul.f32 %v1153, %v781
        %v1664 = vmul.f32 %v1154, %v782
        %v1665 = vmul.f32 %v1155, %v783
        %v1666 = vmul.f32 %v1156, %v784
        %v1667 = vmul.f32 %v1157, %v785
        %v1668 = vmul.f32 %v1158, %v786
        %v1669 = vmul.f32 %v1159, %v787
        %v1670 = vmul.f32 %v1160, %v788
        %v1671 = vmul.f32 %v1161, %v789
        %v1672 = vmul.f32 %v1162, %v790
        %v1673 = vmul.f32 %v1163, %v791
        %v1674 = vmul.f32 %v1164, %v792
        %v1675 = vadd.f32 %v1659, %v1660
        %1676 = vadd.xlane.f32.xlu0 %v1675
        %v1677 = vpop.xlane.xlu0 %1676
        %v1678 = vadd.f32 %v1661, %v1662
        %1679 = vadd.xlane.f32.xlu0 %v1678
        %v1680 = vpop.xlane.xlu0 %1679
        %v1681 = vadd.f32 %v1663, %v1664
        %1682 = vadd.xlane.f32.xlu0 %v1681
        %v1683 = vpop.xlane.xlu0 %1682
        %v1684 = vadd.f32 %v1665, %v1666
        %1685 = vadd.xlane.f32.xlu0 %v1684
        %v1686 = vpop.xlane.xlu0 %1685
        %v1687 = vadd.f32 %v1667, %v1668
        %1688 = vadd.xlane.f32.xlu0 %v1687
        %v1689 = vpop.xlane.xlu0 %1688
        %v1690 = vadd.f32 %v1669, %v1670
        %1691 = vadd.xlane.f32.xlu0 %v1690
        %v1692 = vpop.xlane.xlu0 %1691
        %v1693 = vadd.f32 %v1671, %v1672
        %1694 = vadd.xlane.f32.xlu0 %v1693
        %v1695 = vpop.xlane.xlu0 %1694
        %v1696 = vadd.f32 %v1673, %v1674
        %1697 = vadd.xlane.f32.xlu0 %v1696
        %v1698 = vpop.xlane.xlu0 %1697
        %v1699 = vlaneseq
        %v1700 = vshrl.u32 %v1699, 7
        %v1701 = vsub.s32 5, %v1700
        %v1702 = vrot.slane %v1205, %v1701
        %v1703 = vmul.f32 %v1677, %v1702
        %v1704 = vmul.f32 %v1680, %v1702
        %v1705 = vmul.f32 %v1683, %v1702
        %v1706 = vmul.f32 %v1686, %v1702
        %v1707 = vmul.f32 %v1689, %v1702
        %v1708 = vmul.f32 %v1692, %v1702
        %v1709 = vmul.f32 %v1695, %v1702
        %v1710 = vmul.f32 %v1698, %v1702
        %v1711 = vadd.f32 %v1651, %v1703
        %v1712 = vadd.f32 %v1652, %v1704
        %v1713 = vadd.f32 %v1653, %v1705
        %v1714 = vadd.f32 %v1654, %v1706
        %v1715 = vadd.f32 %v1655, %v1707
        %v1716 = vadd.f32 %v1656, %v1708
        %v1717 = vadd.f32 %v1657, %v1709
        %v1718 = vadd.f32 %v1658, %v1710
        %v1719 = vmul.f32 %v1149, %v837
        %v1720 = vmul.f32 %v1150, %v838
        %v1721 = vmul.f32 %v1151, %v839
        %v1722 = vmul.f32 %v1152, %v840
        %v1723 = vmul.f32 %v1153, %v841
        %v1724 = vmul.f32 %v1154, %v842
        %v1725 = vmul.f32 %v1155, %v843
        %v1726 = vmul.f32 %v1156, %v844
        %v1727 = vmul.f32 %v1157, %v845
        %v1728 = vmul.f32 %v1158, %v846
        %v1729 = vmul.f32 %v1159, %v847
        %v1730 = vmul.f32 %v1160, %v848
        %v1731 = vmul.f32 %v1161, %v849
        %v1732 = vmul.f32 %v1162, %v850
        %v1733 = vmul.f32 %v1163, %v851
        %v1734 = vmul.f32 %v1164, %v852
        %v1735 = vadd.f32 %v1719, %v1720
        %1736 = vadd.xlane.f32.xlu0 %v1735
        %v1737 = vpop.xlane.xlu0 %1736
        %v1738 = vadd.f32 %v1721, %v1722
        %1739 = vadd.xlane.f32.xlu0 %v1738
        %v1740 = vpop.xlane.xlu0 %1739
        %v1741 = vadd.f32 %v1723, %v1724
        %1742 = vadd.xlane.f32.xlu0 %v1741
        %v1743 = vpop.xlane.xlu0 %1742
        %v1744 = vadd.f32 %v1725, %v1726
        %1745 = vadd.xlane.f32.xlu0 %v1744
        %v1746 = vpop.xlane.xlu0 %1745
        %v1747 = vadd.f32 %v1727, %v1728
        %1748 = vadd.xlane.f32.xlu0 %v1747
        %v1749 = vpop.xlane.xlu0 %1748
        %v1750 = vadd.f32 %v1729, %v1730
        %1751 = vadd.xlane.f32.xlu0 %v1750
        %v1752 = vpop.xlane.xlu0 %1751
        %v1753 = vadd.f32 %v1731, %v1732
        %1754 = vadd.xlane.f32.xlu0 %v1753
        %v1755 = vpop.xlane.xlu0 %1754
        %v1756 = vadd.f32 %v1733, %v1734
        %1757 = vadd.xlane.f32.xlu0 %v1756
        %v1758 = vpop.xlane.xlu0 %1757
        %v1759 = vlaneseq
        %v1760 = vshrl.u32 %v1759, 7
        %v1761 = vsub.s32 6, %v1760
        %v1762 = vrot.slane %v1205, %v1761
        %v1763 = vmul.f32 %v1737, %v1762
        %v1764 = vmul.f32 %v1740, %v1762
        %v1765 = vmul.f32 %v1743, %v1762
        %v1766 = vmul.f32 %v1746, %v1762
        %v1767 = vmul.f32 %v1749, %v1762
        %v1768 = vmul.f32 %v1752, %v1762
        %v1769 = vmul.f32 %v1755, %v1762
        %v1770 = vmul.f32 %v1758, %v1762
        %v1771 = vadd.f32 %v1711, %v1763
        %v1772 = vadd.f32 %v1712, %v1764
        %v1773 = vadd.f32 %v1713, %v1765
        %v1774 = vadd.f32 %v1714, %v1766
        %v1775 = vadd.f32 %v1715, %v1767
        %v1776 = vadd.f32 %v1716, %v1768
        %v1777 = vadd.f32 %v1717, %v1769
        %v1778 = vadd.f32 %v1718, %v1770
        %v1779 = vmul.f32 %v1149, %v897
        %v1780 = vmul.f32 %v1150, %v898
        %v1781 = vmul.f32 %v1151, %v899
        %v1782 = vmul.f32 %v1152, %v900
        %v1783 = vmul.f32 %v1153, %v901
        %v1784 = vmul.f32 %v1154, %v902
        %v1785 = vmul.f32 %v1155, %v903
        %v1786 = vmul.f32 %v1156, %v904
        %v1787 = vmul.f32 %v1157, %v905
        %v1788 = vmul.f32 %v1158, %v906
        %v1789 = vmul.f32 %v1159, %v907
        %v1790 = vmul.f32 %v1160, %v908
        %v1791 = vmul.f32 %v1161, %v909
        %v1792 = vmul.f32 %v1162, %v910
        %v1793 = vmul.f32 %v1163, %v911
        %v1794 = vmul.f32 %v1164, %v912
        %v1795 = vadd.f32 %v1779, %v1780
        %1796 = vadd.xlane.f32.xlu0 %v1795
        %v1797 = vpop.xlane.xlu0 %1796
        %v1798 = vadd.f32 %v1781, %v1782
        %1799 = vadd.xlane.f32.xlu0 %v1798
        %v1800 = vpop.xlane.xlu0 %1799
        %v1801 = vadd.f32 %v1783, %v1784
        %1802 = vadd.xlane.f32.xlu0 %v1801
        %v1803 = vpop.xlane.xlu0 %1802
        %v1804 = vadd.f32 %v1785, %v1786
        %1805 = vadd.xlane.f32.xlu0 %v1804
        %v1806 = vpop.xlane.xlu0 %1805
        %v1807 = vadd.f32 %v1787, %v1788
        %1808 = vadd.xlane.f32.xlu0 %v1807
        %v1809 = vpop.xlane.xlu0 %1808
        %v1810 = vadd.f32 %v1789, %v1790
        %1811 = vadd.xlane.f32.xlu0 %v1810
        %v1812 = vpop.xlane.xlu0 %1811
        %v1813 = vadd.f32 %v1791, %v1792
        %1814 = vadd.xlane.f32.xlu0 %v1813
        %v1815 = vpop.xlane.xlu0 %1814
        %v1816 = vadd.f32 %v1793, %v1794
        %1817 = vadd.xlane.f32.xlu0 %v1816
        %v1818 = vpop.xlane.xlu0 %1817
        %v1819 = vlaneseq
        %v1820 = vshrl.u32 %v1819, 7
        %v1821 = vsub.s32 7, %v1820
        %v1822 = vrot.slane %v1205, %v1821
        %v1823 = vmul.f32 %v1797, %v1822
        %v1824 = vmul.f32 %v1800, %v1822
        %v1825 = vmul.f32 %v1803, %v1822
        %v1826 = vmul.f32 %v1806, %v1822
        %v1827 = vmul.f32 %v1809, %v1822
        %v1828 = vmul.f32 %v1812, %v1822
        %v1829 = vmul.f32 %v1815, %v1822
        %v1830 = vmul.f32 %v1818, %v1822
        %v1831 = vadd.f32 %v1771, %v1823
        %v1832 = vadd.f32 %v1772, %v1824
        %v1833 = vadd.f32 %v1773, %v1825
        %v1834 = vadd.f32 %v1774, %v1826
        %v1835 = vadd.f32 %v1775, %v1827
        %v1836 = vadd.f32 %v1776, %v1828
        %v1837 = vadd.f32 %v1777, %v1829
        %v1838 = vadd.f32 %v1778, %v1830
        %1839 = vst [vmem:[%s346] sm:$0xff] %v1831
        %1840 = vst [vmem:[%s346 + $0x8] sm:$0xff] %v1832
        %1841 = vst [vmem:[%s346 + $0x10] sm:$0xff] %v1833
        %1842 = vst [vmem:[%s346 + $0x18] sm:$0xff] %v1834
        %1843 = vst [vmem:[%s346 + $0x20] sm:$0xff] %v1835
        %1844 = vst [vmem:[%s346 + $0x28] sm:$0xff] %v1836
        %1845 = vst [vmem:[%s346 + $0x30] sm:$0xff] %v1837
        %1846 = vst [vmem:[%s346 + $0x38] sm:$0xff] %v1838
        %s1847 = sand.u32 %s195, 1
        %s1848 = scalar_lea.sflag [#allocation4], %s1847
        %s1849 = sand.u32 %s195, 1
        %s1850 = smul.addr %s1849, 64
        %s1851 = scalar_lea.vmem [#allocation7], %s1850
        // Predicated region
        $region57: #{tpu_custom_call.1} parent=47 // pred_check
          %p1852 = pneg %p205
        $region58: #{tpu_custom_call.1} parent=47 // pred_check_branch
          %1854 = sbr.rel (%p1852) target = $region60
        $region59: #{tpu_custom_call.1} parent=47 // pred_region
          %s1855 = smul.u32 8, %s25
          %s1857 = ssub.s32 1024, 1024
          %1858 = vsyncadd %s1848, %s1857
          %s1859 = smul.addr %s1855, 128
          %s1860 = scalar_lea.hbm %s7, %s1859
          %s1861 = sshll.u32 %s1851, 4
          %s1862 = int_to_ptr.vmem [resolvable:$true] %s1861
          %1867 = dma.vmem_to_hbm [thread:$0]  %s1862, 1024, %s1860, %s1848, 128, 128, 8
        $region60: #{tpu_custom_call.1} parent=47 // pred_fallthru
          _
      $region48: #{tpu_custom_call.1} parent=5 // pred_fallthru
        _
      %p1868 = scmp.le.s32.totalorder 2, %s20
      // Predicated region
      $region61: #{tpu_custom_call.1} parent=5 // pred_check
        %p1869 = pneg %p1868
      $region62: #{tpu_custom_call.1} parent=5 // pred_check_branch
        %1871 = sbr.rel (%p1869) target = $region64
      $region63: #{tpu_custom_call.1} parent=5 // pred_region
        %s1872 = ssub.s32 %s20, 2
        // Predicated region
        $region65: #{tpu_custom_call.1} parent=63 // pred_check
          %p1873 = pneg %p211
        $region66: #{tpu_custom_call.1} parent=63 // pred_check_branch
          %1875 = sbr.rel (%p1873) target = $region68
        $region67: #{tpu_custom_call.1} parent=63 // pred_region
          %s1876 = sand.u32 %s196, 1
          %s1877 = scalar_lea.sflag [#allocation4], %s1876
          %s1878 = sand.u32 %s196, 1
          %s1879 = smul.addr %s1878, 64
          %s1880 = scalar_lea.vmem [#allocation7], %s1879
          %1881 = dma.done %s1877, 1024
        $region68: #{tpu_custom_call.1} parent=63 // pred_fallthru
          _
      $region64: #{tpu_custom_call.1} parent=5 // pred_fallthru
        _
    $region6: #{tpu_custom_call.1} parent=1 // loop_footer
      %s24 = sadd.s32 1, %s20
    $region7: #{tpu_custom_call.1} parent=1 // loop_footer_branch
      %19 = sbr.rel target = $region3
    $region8: #{tpu_custom_call.1} parent=1 // loop_exit
      _
    %1882 = vsyncpa [#allocation3], 1
    %s1883 = scalar_lea.sflag [#allocation3], 1
    %1884 = vsyncpa %s1883, 1
    %1885 = vsyncpa [#allocation6], 1
    %s1886 = scalar_lea.sflag [#allocation6], 1
    %1887 = vsyncpa %s1886, 1
    %1888 = vsyncpa [#allocation4], 1
    %s1889 = scalar_lea.sflag [#allocation4], 1
    %1890 = vsyncpa %s1889, 1

</llo_original>
